<compile_context>
chip_gen: v6e
topology: v6e:2x2x1
jax: 0.10.0
libtpu: 0.0.40
codegen_flags: <defaults>
</compile_context>

<pallas_src>
import math

import jax
import jax.numpy as jnp
from jax.experimental import pallas as pl
from jax.experimental.pallas import tpu as pltpu

# Config (matches the dataclass in the reference module)
S = 64          # seq_len
D = 128         # d_model
H = 4           # num_heads
HD = D // H     # head_dim = 32


def attention_kernel(x_ref, mask_ref, wqkvg_ref, bqkvg_ref, wpp_ref, bpp_ref, o_ref):
    x = x_ref[...]                                        # (S, D)   bf16
    mask = mask_ref[...].astype(jnp.float32)              # (S, S)   bf16 -> f32 (0/-inf exact)

    # Fused Q/K/VG projection: one (S,128)@(128,512) matmul, f32 accumulation.
    # 1/sqrt(head_dim) is already folded into the q columns / bias at init.
    qkvg = jnp.dot(x, wqkvg_ref[...],
                   preferred_element_type=jnp.float32) + bqkvg_ref[...]   # (S, 4D) f32

    # Slices land on 128-lane vreg boundaries (free).
    q = qkvg[:, 0 * D:1 * D].astype(jnp.bfloat16)         # (S, D)  (pre-scaled)
    k = qkvg[:, 1 * D:2 * D].astype(jnp.bfloat16)         # (S, D)
    vg = qkvg[:, 2 * D:4 * D].astype(jnp.bfloat16)        # (S, 2D) per-head [v_h | g_h]

    # Static unroll over the 4 heads; independent MXU pushes interleave in the
    # LLO schedule.  Per-head outputs stay in registers.
    head_outs = []
    for h in range(H):
        sl = slice(h * HD, (h + 1) * HD)
        qh, kh = q[:, sl], k[:, sl]                       # (S, HD) bf16

        # q @ k^T contracting over head_dim -- no explicit transpose of k.
        s = jax.lax.dot_general(
            qh, kh,
            dimension_numbers=(((1,), (1,)), ((), ())),
            preferred_element_type=jnp.float32) + mask    # (S, S) f32

        s_max = jnp.max(s, axis=-1, keepdims=True)
        p = jnp.exp(s - s_max)
        inv = pl.reciprocal(jnp.sum(p, axis=-1, keepdims=True), approx=True)
        p = (p * inv).astype(jnp.bfloat16)                # softmax(dim=-1)
        # attn_dropout: identity in eval mode

        # Fused p @ [v_h | g_h]: one (64,64)@(64,64) matmul per head.
        vg_h = vg[:, h * 2 * HD:(h + 1) * 2 * HD]         # (S, 2*HD) bf16
        o = jnp.dot(p, vg_h, preferred_element_type=jnp.float32)   # (S, 2*HD) f32
        # F.silu(g) * v is elementwise -> apply per head before the concat.
        head_outs.append(jax.nn.silu(o[:, HD:]) * o[:, :HD])       # (S, HD) f32

    # transpose(1,2).view(...) == concatenating heads along the feature axis.
    y = jnp.concatenate(head_outs, axis=-1)               # (S, D) f32, lane-dense

    # self.proj applied twice in the torch code, composed offline:
    #   wpp = wp_t @ wp_t,  bpp = bp @ wp_t + bp   ->   one matmul here.
    y = jnp.dot(y.astype(jnp.bfloat16), wpp_ref[...],
                preferred_element_type=jnp.float32) + bpp_ref[...]
    # res_dropout: identity in eval mode
    o_ref[...] = y


def attention_forward(x, mask, params):
    """x: (1, S, D), mask: (1, 1, Smax, Smax) -> (1, S, D)"""
    batch, seq_len, d_model = x.shape
    assert batch == 1, "reference module's .view() only works for batch == 1"
    x2d = x[0].astype(jnp.bfloat16)
    # 0 / -inf mask values are exact in bf16; halves the mask DMA bytes.
    m2d = mask[0, 0, :seq_len, :seq_len].astype(jnp.bfloat16)

    args = (x2d, m2d,
            params["wqkvg"], params["bqkvg"], params["wpp_bf16"], params["bpp"])

    # Advisory cost for the XLA scheduler (sub-microsecond custom call).
    flops = (2 * seq_len * d_model * 4 * d_model          # fused qkvg projection
             + H * 2 * seq_len * seq_len * HD             # scores
             + H * 2 * seq_len * seq_len * 2 * HD         # fused p@[v|g]
             + 2 * seq_len * d_model * d_model)           # composed projection (once)
    transcendentals = H * seq_len * seq_len + seq_len * d_model + H * seq_len
    bytes_accessed = (x2d.size * 2 + m2d.size * 2
                      + params["wqkvg"].size * 2 + params["bqkvg"].size * 4
                      + params["wpp_bf16"].size * 2 + params["bpp"].size * 4
                      + seq_len * d_model * 4)

    vmem = pl.BlockSpec(memory_space=pltpu.MemorySpace.VMEM)
    out2d = pl.pallas_call(
        attention_kernel,
        out_shape=jax.ShapeDtypeStruct((seq_len, d_model), jnp.float32),
        in_specs=[vmem] * len(args),
        out_specs=vmem,
        cost_estimate=pl.CostEstimate(flops=flops,
                                      transcendentals=transcendentals,
                                      bytes_accessed=bytes_accessed),
    )(*args)
    return out2d[None]


def init_params(key):
    """Deterministic nn.Linear-style init (uniform +-1/sqrt(fan_in))."""
    ks = jax.random.split(key, 10)
    bound = 1.0 / math.sqrt(D)

    def linear(kw, kb):
        w = jax.random.uniform(kw, (D, D), jnp.float32, -bound, bound)   # PyTorch (out, in)
        b = jax.random.uniform(kb, (D,), jnp.float32, -bound, bound)
        return w, b

    wk, bk = linear(ks[0], ks[1])
    wq, bq = linear(ks[2], ks[3])
    wv, bv = linear(ks[4], ks[5])
    wg, bg = linear(ks[6], ks[7])
    wp, bp = linear(ks[8], ks[9])

    wq_t, wk_t, wv_t, wg_t, wp_t = wq.T, wk.T, wv.T, wg.T, wp.T
    scale = 1.0 / math.sqrt(HD)

    # Fused kernel weight, columns: [q*scale | k | v0 g0 | v1 g1 | v2 g2 | v3 g3]
    # so each head's (v_h || g_h) is a contiguous 64-lane slice for the fused PV matmul.
    vg_w, vg_b = [], []
    for h in range(H):
        sl = slice(h * HD, (h + 1) * HD)
        vg_w.extend([wv_t[:, sl], wg_t[:, sl]])
        vg_b.extend([bv[sl], bg[sl]])
    wqkvg = jnp.concatenate([wq_t * scale, wk_t] + vg_w, axis=1)        # (D, 4D)
    bqkvg = jnp.concatenate([bq * scale, bk] + vg_b)[None]              # (1, 4D)

    # Compose the doubled projection offline (f32 compose, bf16 weight for MXU):
    #   y2 = (y @ wp_t + bp) @ wp_t + bp = y @ (wp_t @ wp_t) + (bp @ wp_t + bp)
    wpp = wp_t @ wp_t                                                   # (D, D) f32
    bpp = (bp @ wp_t + bp)[None]                                        # (1, D) f32

    return {
        "wqkvg": wqkvg.astype(jnp.bfloat16),
        "bqkvg": bqkvg,
        "wpp_bf16": wpp.astype(jnp.bfloat16),
        "bpp": bpp,
        # f32 copies for the pure-JAX reference
        "wq_t": wq_t, "wk_t": wk_t, "wv_t": wv_t, "wg_t": wg_t, "wp_t": wp_t,
        "bq": bq[None], "bk": bk[None], "bv": bv[None], "bg": bg[None], "bp": bp[None],
    }


def reference_forward(x, mask, params):
    """Pure-JAX f32 replica of the PyTorch forward (eval mode), for validation."""
    x2d = x[0].astype(jnp.float32)

    def lin(wt, b):
        return x2d @ wt + b[0]

    def split_heads(t):  # (S, D) -> (H, S, HD)
        return t.reshape(S, H, HD).transpose(1, 0, 2)

    q = split_heads(lin(params["wq_t"], params["bq"]))
    k = split_heads(lin(params["wk_t"], params["bk"]))
    v = split_heads(lin(params["wv_t"], params["bv"]))
    g = split_heads(lin(params["wg_t"], params["bg"]))

    s = jnp.einsum("hqd,hkd->hqk", q, k) / math.sqrt(HD) + mask[0, 0, :S, :S]
    p = jax.nn.softmax(s.astype(jnp.float32), axis=-1)

    ov = jnp.einsum("hqk,hkd->hqd", p, v).transpose(1, 0, 2).reshape(S, D)
    og = jnp.einsum("hqk,hkd->hqd", p, g).transpose(1, 0, 2).reshape(S, D)

    y = jax.nn.silu(og) * ov
    y = y @ params["wp_t"] + params["bp"][0]
    y = y @ params["wp_t"] + params["bp"][0]           # proj applied twice, as in torch
    return y[None]


if __name__ == "__main__":
    key = jax.random.PRNGKey(0)
    pkey, xkey = jax.random.split(key)
    params = init_params(pkey)

    # inputs: batch must be 1 (forced by the module's .view()); causal mask
    x = jax.random.normal(xkey, (1, S, D), jnp.float32)
    causal = jnp.tril(jnp.ones((S, S), dtype=bool))
    mask = jnp.where(causal, 0.0, -jnp.inf).astype(jnp.float32)[None, None]   # (1,1,S,S)

    out = attention_forward(x, mask, params)
    jax.block_until_ready(out)

    ref = reference_forward(x, mask, params)
    assert out.shape == (1, S, D)
    # bf16 MXU inputs (f32 accumulation) + composed bf16 projection weight vs
    # pure-f32 reference -> slightly looser tolerance.
    max_err = float(jnp.max(jnp.abs(out - ref)))
    assert jnp.allclose(out, ref, rtol=2e-2, atol=3e-2), f"mismatch vs reference, max_err={max_err}"

    print("KERNEL_OK")
</pallas_src>

<mosaic_0001>
module attributes {stable_mosaic.version = 11 : i64} {
  func.func @attention_kernel(%arg0: memref<64x128xbf16, #tpu.memory_space<vmem>>, %arg1: memref<64x64xbf16, #tpu.memory_space<vmem>>, %arg2: memref<128x512xbf16, #tpu.memory_space<vmem>>, %arg3: memref<1x512xf32, #tpu.memory_space<vmem>>, %arg4: memref<128x128xbf16, #tpu.memory_space<vmem>>, %arg5: memref<1x128xf32, #tpu.memory_space<vmem>>, %arg6: memref<64x128xf32, #tpu.memory_space<vmem>>) attributes {dimension_semantics = [], scalar_prefetch = 0 : i64, scratch_operands = 0 : i64, tpu.core_type = #tpu.core_type<tc>} {
    %c0 = arith.constant 0 : index
    %c0_0 = arith.constant 0 : index
    %0 = vector.load %arg0[%c0, %c0_0] : memref<64x128xbf16, #tpu.memory_space<vmem>>, vector<64x128xbf16>
    %c0_1 = arith.constant 0 : index
    %c0_2 = arith.constant 0 : index
    %1 = vector.load %arg1[%c0_1, %c0_2] : memref<64x64xbf16, #tpu.memory_space<vmem>>, vector<64x64xbf16>
    %2 = arith.extf %1 : vector<64x64xbf16> to vector<64x64xf32>
    %c0_3 = arith.constant 0 : index
    %c0_4 = arith.constant 0 : index
    %3 = vector.load %arg2[%c0_3, %c0_4] : memref<128x512xbf16, #tpu.memory_space<vmem>>, vector<128x512xbf16>
    %cst = arith.constant dense<0.000000e+00> : vector<64x512xf32>
    %4 = tpu.matmul %0, %3, %cst {dimension_numbers = #tpu.dot_dimension_numbers<[1], [0], [0], [1], [0, 0, 1, 1], [], []>} : vector<64x128xbf16>, vector<128x512xbf16>, vector<64x512xf32> -> vector<64x512xf32>
    %c0_5 = arith.constant 0 : index
    %c0_6 = arith.constant 0 : index
    %5 = vector.load %arg3[%c0_5, %c0_6] : memref<1x512xf32, #tpu.memory_space<vmem>>, vector<1x512xf32>
    %6 = vector.broadcast %5 : vector<1x512xf32> to vector<64x512xf32>
    %7 = arith.addf %4, %6 : vector<64x512xf32>
    %8 = vector.extract_strided_slice %7 {offsets = [0, 0], sizes = [64, 128], strides = [1, 1]} : vector<64x512xf32> to vector<64x128xf32>
    %9 = arith.truncf %8 : vector<64x128xf32> to vector<64x128xbf16>
    %10 = vector.extract_strided_slice %7 {offsets = [0, 128], sizes = [64, 128], strides = [1, 1]} : vector<64x512xf32> to vector<64x128xf32>
    %11 = arith.truncf %10 : vector<64x128xf32> to vector<64x128xbf16>
    %12 = vector.extract_strided_slice %7 {offsets = [0, 256], sizes = [64, 256], strides = [1, 1]} : vector<64x512xf32> to vector<64x256xf32>
    %13 = arith.truncf %12 : vector<64x256xf32> to vector<64x256xbf16>
    %14 = vector.extract_strided_slice %9 {offsets = [0, 0], sizes = [64, 32], strides = [1, 1]} : vector<64x128xbf16> to vector<64x32xbf16>
    %15 = vector.extract_strided_slice %11 {offsets = [0, 0], sizes = [64, 32], strides = [1, 1]} : vector<64x128xbf16> to vector<64x32xbf16>
    %cst_7 = arith.constant dense<0.000000e+00> : vector<64x64xf32>
    %16 = tpu.matmul %14, %15, %cst_7 {dimension_numbers = #tpu.dot_dimension_numbers<[1], [1], [0], [0], [0, 0, 1, 0], [], []>} : vector<64x32xbf16>, vector<64x32xbf16>, vector<64x64xf32> -> vector<64x64xf32>
    %17 = arith.addf %16, %2 : vector<64x64xf32>
    %cst_8 = arith.constant dense<0xFF800000> : vector<64xf32>
    %18 = vector.multi_reduction <maximumf>, %17, %cst_8 [1] : vector<64x64xf32> to vector<64xf32>
    %19 = vector.shape_cast %18 : vector<64xf32> to vector<64x1xf32>
    %20 = vector.broadcast %19 : vector<64x1xf32> to vector<64x64xf32>
    %21 = arith.subf %17, %20 : vector<64x64xf32>
    %22 = math.exp %21 : vector<64x64xf32>
    %cst_9 = arith.constant dense<0.000000e+00> : vector<64xf32>
    %23 = vector.multi_reduction <add>, %22, %cst_9 [1] : vector<64x64xf32> to vector<64xf32>
    %24 = vector.shape_cast %23 : vector<64xf32> to vector<64x1xf32>
    %25 = tpu.reciprocal %24 {approx = true} : vector<64x1xf32> -> vector<64x1xf32>
    %26 = vector.broadcast %25 : vector<64x1xf32> to vector<64x64xf32>
    %27 = arith.mulf %22, %26 : vector<64x64xf32>
    %28 = arith.truncf %27 : vector<64x64xf32> to vector<64x64xbf16>
    %29 = vector.extract_strided_slice %13 {offsets = [0, 0], sizes = [64, 64], strides = [1, 1]} : vector<64x256xbf16> to vector<64x64xbf16>
    %cst_10 = arith.constant dense<0.000000e+00> : vector<64x64xf32>
    %30 = tpu.matmul %28, %29, %cst_10 {dimension_numbers = #tpu.dot_dimension_numbers<[1], [0], [0], [1], [0, 0, 1, 1], [], []>} : vector<64x64xbf16>, vector<64x64xbf16>, vector<64x64xf32> -> vector<64x64xf32>
    %31 = vector.extract_strided_slice %30 {offsets = [0, 32], sizes = [64, 32], strides = [1, 1]} : vector<64x64xf32> to vector<64x32xf32>
    %32 = arith.negf %31 : vector<64x32xf32>
    %33 = math.exp %32 : vector<64x32xf32>
    %cst_11 = arith.constant 1.000000e+00 : f32
    %34 = vector.broadcast %cst_11 : f32 to vector<64x32xf32>
    %35 = arith.addf %34, %33 : vector<64x32xf32>
    %36 = arith.divf %34, %35 : vector<64x32xf32>
    %37 = arith.mulf %31, %36 : vector<64x32xf32>
    %38 = vector.extract_strided_slice %30 {offsets = [0, 0], sizes = [64, 32], strides = [1, 1]} : vector<64x64xf32> to vector<64x32xf32>
    %39 = arith.mulf %37, %38 : vector<64x32xf32>
    %40 = vector.extract_strided_slice %9 {offsets = [0, 32], sizes = [64, 32], strides = [1, 1]} : vector<64x128xbf16> to vector<64x32xbf16>
    %41 = vector.extract_strided_slice %11 {offsets = [0, 32], sizes = [64, 32], strides = [1, 1]} : vector<64x128xbf16> to vector<64x32xbf16>
    %cst_12 = arith.constant dense<0.000000e+00> : vector<64x64xf32>
    %42 = tpu.matmul %40, %41, %cst_12 {dimension_numbers = #tpu.dot_dimension_numbers<[1], [1], [0], [0], [0, 0, 1, 0], [], []>} : vector<64x32xbf16>, vector<64x32xbf16>, vector<64x64xf32> -> vector<64x64xf32>
    %43 = arith.addf %42, %2 : vector<64x64xf32>
    %cst_13 = arith.constant dense<0xFF800000> : vector<64xf32>
    %44 = vector.multi_reduction <maximumf>, %43, %cst_13 [1] : vector<64x64xf32> to vector<64xf32>
    %45 = vector.shape_cast %44 : vector<64xf32> to vector<64x1xf32>
    %46 = vector.broadcast %45 : vector<64x1xf32> to vector<64x64xf32>
    %47 = arith.subf %43, %46 : vector<64x64xf32>
    %48 = math.exp %47 : vector<64x64xf32>
    %cst_14 = arith.constant dense<0.000000e+00> : vector<64xf32>
    %49 = vector.multi_reduction <add>, %48, %cst_14 [1] : vector<64x64xf32> to vector<64xf32>
    %50 = vector.shape_cast %49 : vector<64xf32> to vector<64x1xf32>
    %51 = tpu.reciprocal %50 {approx = true} : vector<64x1xf32> -> vector<64x1xf32>
    %52 = vector.broadcast %51 : vector<64x1xf32> to vector<64x64xf32>
    %53 = arith.mulf %48, %52 : vector<64x64xf32>
    %54 = arith.truncf %53 : vector<64x64xf32> to vector<64x64xbf16>
    %55 = vector.extract_strided_slice %13 {offsets = [0, 64], sizes = [64, 64], strides = [1, 1]} : vector<64x256xbf16> to vector<64x64xbf16>
    %cst_15 = arith.constant dense<0.000000e+00> : vector<64x64xf32>
    %56 = tpu.matmul %54, %55, %cst_15 {dimension_numbers = #tpu.dot_dimension_numbers<[1], [0], [0], [1], [0, 0, 1, 1], [], []>} : vector<64x64xbf16>, vector<64x64xbf16>, vector<64x64xf32> -> vector<64x64xf32>
    %57 = vector.extract_strided_slice %56 {offsets = [0, 32], sizes = [64, 32], strides = [1, 1]} : vector<64x64xf32> to vector<64x32xf32>
    %58 = arith.negf %57 : vector<64x32xf32>
    %59 = math.exp %58 : vector<64x32xf32>
    %cst_16 = arith.constant 1.000000e+00 : f32
    %60 = vector.broadcast %cst_16 : f32 to vector<64x32xf32>
    %61 = arith.addf %60, %59 : vector<64x32xf32>
    %62 = arith.divf %60, %61 : vector<64x32xf32>
    %63 = arith.mulf %57, %62 : vector<64x32xf32>
    %64 = vector.extract_strided_slice %56 {offsets = [0, 0], sizes = [64, 32], strides = [1, 1]} : vector<64x64xf32> to vector<64x32xf32>
    %65 = arith.mulf %63, %64 : vector<64x32xf32>
    %66 = vector.extract_strided_slice %9 {offsets = [0, 64], sizes = [64, 32], strides = [1, 1]} : vector<64x128xbf16> to vector<64x32xbf16>
    %67 = vector.extract_strided_slice %11 {offsets = [0, 64], sizes = [64, 32], strides = [1, 1]} : vector<64x128xbf16> to vector<64x32xbf16>
    %cst_17 = arith.constant dense<0.000000e+00> : vector<64x64xf32>
    %68 = tpu.matmul %66, %67, %cst_17 {dimension_numbers = #tpu.dot_dimension_numbers<[1], [1], [0], [0], [0, 0, 1, 0], [], []>} : vector<64x32xbf16>, vector<64x32xbf16>, vector<64x64xf32> -> vector<64x64xf32>
    %69 = arith.addf %68, %2 : vector<64x64xf32>
    %cst_18 = arith.constant dense<0xFF800000> : vector<64xf32>
    %70 = vector.multi_reduction <maximumf>, %69, %cst_18 [1] : vector<64x64xf32> to vector<64xf32>
    %71 = vector.shape_cast %70 : vector<64xf32> to vector<64x1xf32>
    %72 = vector.broadcast %71 : vector<64x1xf32> to vector<64x64xf32>
    %73 = arith.subf %69, %72 : vector<64x64xf32>
    %74 = math.exp %73 : vector<64x64xf32>
    %cst_19 = arith.constant dense<0.000000e+00> : vector<64xf32>
    %75 = vector.multi_reduction <add>, %74, %cst_19 [1] : vector<64x64xf32> to vector<64xf32>
    %76 = vector.shape_cast %75 : vector<64xf32> to vector<64x1xf32>
    %77 = tpu.reciprocal %76 {approx = true} : vector<64x1xf32> -> vector<64x1xf32>
    %78 = vector.broadcast %77 : vector<64x1xf32> to vector<64x64xf32>
    %79 = arith.mulf %74, %78 : vector<64x64xf32>
    %80 = arith.truncf %79 : vector<64x64xf32> to vector<64x64xbf16>
    %81 = vector.extract_strided_slice %13 {offsets = [0, 128], sizes = [64, 64], strides = [1, 1]} : vector<64x256xbf16> to vector<64x64xbf16>
    %cst_20 = arith.constant dense<0.000000e+00> : vector<64x64xf32>
    %82 = tpu.matmul %80, %81, %cst_20 {dimension_numbers = #tpu.dot_dimension_numbers<[1], [0], [0], [1], [0, 0, 1, 1], [], []>} : vector<64x64xbf16>, vector<64x64xbf16>, vector<64x64xf32> -> vector<64x64xf32>
    %83 = vector.extract_strided_slice %82 {offsets = [0, 32], sizes = [64, 32], strides = [1, 1]} : vector<64x64xf32> to vector<64x32xf32>
    %84 = arith.negf %83 : vector<64x32xf32>
    %85 = math.exp %84 : vector<64x32xf32>
    %cst_21 = arith.constant 1.000000e+00 : f32
    %86 = vector.broadcast %cst_21 : f32 to vector<64x32xf32>
    %87 = arith.addf %86, %85 : vector<64x32xf32>
    %88 = arith.divf %86, %87 : vector<64x32xf32>
    %89 = arith.mulf %83, %88 : vector<64x32xf32>
    %90 = vector.extract_strided_slice %82 {offsets = [0, 0], sizes = [64, 32], strides = [1, 1]} : vector<64x64xf32> to vector<64x32xf32>
    %91 = arith.mulf %89, %90 : vector<64x32xf32>
    %92 = vector.extract_strided_slice %9 {offsets = [0, 96], sizes = [64, 32], strides = [1, 1]} : vector<64x128xbf16> to vector<64x32xbf16>
    %93 = vector.extract_strided_slice %11 {offsets = [0, 96], sizes = [64, 32], strides = [1, 1]} : vector<64x128xbf16> to vector<64x32xbf16>
    %cst_22 = arith.constant dense<0.000000e+00> : vector<64x64xf32>
    %94 = tpu.matmul %92, %93, %cst_22 {dimension_numbers = #tpu.dot_dimension_numbers<[1], [1], [0], [0], [0, 0, 1, 0], [], []>} : vector<64x32xbf16>, vector<64x32xbf16>, vector<64x64xf32> -> vector<64x64xf32>
    %95 = arith.addf %94, %2 : vector<64x64xf32>
    %cst_23 = arith.constant dense<0xFF800000> : vector<64xf32>
    %96 = vector.multi_reduction <maximumf>, %95, %cst_23 [1] : vector<64x64xf32> to vector<64xf32>
    %97 = vector.shape_cast %96 : vector<64xf32> to vector<64x1xf32>
    %98 = vector.broadcast %97 : vector<64x1xf32> to vector<64x64xf32>
    %99 = arith.subf %95, %98 : vector<64x64xf32>
    %100 = math.exp %99 : vector<64x64xf32>
    %cst_24 = arith.constant dense<0.000000e+00> : vector<64xf32>
    %101 = vector.multi_reduction <add>, %100, %cst_24 [1] : vector<64x64xf32> to vector<64xf32>
    %102 = vector.shape_cast %101 : vector<64xf32> to vector<64x1xf32>
    %103 = tpu.reciprocal %102 {approx = true} : vector<64x1xf32> -> vector<64x1xf32>
    %104 = vector.broadcast %103 : vector<64x1xf32> to vector<64x64xf32>
    %105 = arith.mulf %100, %104 : vector<64x64xf32>
    %106 = arith.truncf %105 : vector<64x64xf32> to vector<64x64xbf16>
    %107 = vector.extract_strided_slice %13 {offsets = [0, 192], sizes = [64, 64], strides = [1, 1]} : vector<64x256xbf16> to vector<64x64xbf16>
    %cst_25 = arith.constant dense<0.000000e+00> : vector<64x64xf32>
    %108 = tpu.matmul %106, %107, %cst_25 {dimension_numbers = #tpu.dot_dimension_numbers<[1], [0], [0], [1], [0, 0, 1, 1], [], []>} : vector<64x64xbf16>, vector<64x64xbf16>, vector<64x64xf32> -> vector<64x64xf32>
    %109 = vector.extract_strided_slice %108 {offsets = [0, 32], sizes = [64, 32], strides = [1, 1]} : vector<64x64xf32> to vector<64x32xf32>
    %110 = arith.negf %109 : vector<64x32xf32>
    %111 = math.exp %110 : vector<64x32xf32>
    %cst_26 = arith.constant 1.000000e+00 : f32
    %112 = vector.broadcast %cst_26 : f32 to vector<64x32xf32>
    %113 = arith.addf %112, %111 : vector<64x32xf32>
    %114 = arith.divf %112, %113 : vector<64x32xf32>
    %115 = arith.mulf %109, %114 : vector<64x32xf32>
    %116 = vector.extract_strided_slice %108 {offsets = [0, 0], sizes = [64, 32], strides = [1, 1]} : vector<64x64xf32> to vector<64x32xf32>
    %117 = arith.mulf %115, %116 : vector<64x32xf32>
    %118 = tpu.concatenate %39, %65, %91, %117 in 1 : vector<64x32xf32>, vector<64x32xf32>, vector<64x32xf32>, vector<64x32xf32> -> vector<64x128xf32>
    %119 = arith.truncf %118 : vector<64x128xf32> to vector<64x128xbf16>
    %c0_27 = arith.constant 0 : index
    %c0_28 = arith.constant 0 : index
    %120 = vector.load %arg4[%c0_27, %c0_28] : memref<128x128xbf16, #tpu.memory_space<vmem>>, vector<128x128xbf16>
    %cst_29 = arith.constant dense<0.000000e+00> : vector<64x128xf32>
    %121 = tpu.matmul %119, %120, %cst_29 {dimension_numbers = #tpu.dot_dimension_numbers<[1], [0], [0], [1], [0, 0, 1, 1], [], []>} : vector<64x128xbf16>, vector<128x128xbf16>, vector<64x128xf32> -> vector<64x128xf32>
    %c0_30 = arith.constant 0 : index
    %c0_31 = arith.constant 0 : index
    %122 = vector.load %arg5[%c0_30, %c0_31] : memref<1x128xf32, #tpu.memory_space<vmem>>, vector<1x128xf32>
    %123 = vector.broadcast %122 : vector<1x128xf32> to vector<64x128xf32>
    %124 = arith.addf %121, %123 : vector<64x128xf32>
    %c0_32 = arith.constant 0 : index
    %c0_33 = arith.constant 0 : index
    %125 = vector.load %arg6[%c0_32, %c0_33] : memref<64x128xf32, #tpu.memory_space<vmem>>, vector<64x128xf32>
    tpu.vector_store %arg6[%c0_32, %c0_33], %124 {strides = array<i32>} : memref<64x128xf32, #tpu.memory_space<vmem>>, vector<64x128xf32>,
    return
  }
}

</mosaic_0001>

<llo_original>
// kernel: tpu_custom_call.1
$region0: #{tpu_custom_call.1}
  #allocation0 [shape = 'u32[]', space=smem, size = 0x4, offset = 0x4, fixed_abs, tag = 'smem constant byte address 0x4 - core index']
  #allocation1 [shape = 'u32[144,128]{1,0:T(1,128)}', space=vmem, size = 0x12000, scoped, tag = 'internal scratch']
  %s0 = inlined_call_operand.hbm [shape: bf16[64,128], index: 0, kind: input, shape index: {}]
  %s1 = inlined_call_operand.hbm [shape: bf16[64,64], index: 1, kind: input, shape index: {}]
  %s2 = inlined_call_operand.hbm [shape: bf16[128,512], index: 2, kind: input, shape index: {}]
  %s3 = inlined_call_operand.vmem [shape: f32[1,512], index: 3, kind: input, shape index: {}]
  %s4 = inlined_call_operand.hbm [shape: bf16[128,128], index: 4, kind: input, shape index: {}]
  %s5 = inlined_call_operand.vmem [shape: f32[1,128], index: 5, kind: input, shape index: {}]
  %s6 = inlined_call_operand.hbm [shape: f32[64,128], index: 6, kind: output, shape index: {}]
  %s7 = sld [smem:[#allocation0]]
  $region50: #{tpu_custom_call.1} parent=0
    _
  %s9 = ssub.s32 1, %s7
  %s10 = scalar_select 0, %s9, %s7
  $region1: #{tpu_custom_call.1} parent=0
    #allocation2 [shape = 'u8[16384]{0}', space=vmem, size = 0x4000, scoped, tag = 'input window, operand 0, single buffered']
    #allocation3 [shape = 's32[1]{0}', space=sflag, size = 0x4, scoped, tag = 'scoped memory for tpu_custom_call.1']
    #allocation4 [shape = 's32[1]{0}', space=sflag, size = 0x4, scoped, tag = 'scoped memory for tpu_custom_call.1']
    #allocation5 [shape = 'u8[16384]{0}', space=vmem, size = 0x4000, scoped, tag = 'input window, operand 1, single buffered']
    #allocation6 [shape = 's32[1]{0}', space=sflag, size = 0x4, scoped, tag = 'scoped memory for tpu_custom_call.1']
    #allocation7 [shape = 'u8[131072]{0}', space=vmem, size = 0x20000, scoped, tag = 'input window, operand 2, single buffered']
    #allocation8 [shape = 'u8[32768]{0}', space=vmem, size = 0x8000, scoped, tag = 'input window, operand 4, single buffered']
    #allocation9 [shape = 's32[1]{0}', space=sflag, size = 0x4, scoped, tag = 'scoped memory for tpu_custom_call.1']
    #allocation10 [shape = 'u8[32768]{0}', space=vmem, size = 0x8000, scoped, tag = 'output window, operand 0, single buffered']
    %11 = vsyncpa [#allocation3], 0
    %12 = vsyncpa [#allocation6], 0
    %13 = vsyncpa [#allocation9], 0
    %14 = vsyncpa [#allocation4], 0
    // Predicated region
    $region2: #{tpu_custom_call.1} parent=1 // pred_check
      _
    $region3: #{tpu_custom_call.1} parent=1 // pred_check_branch
      %16 = sbr.rel (0) target = $region5
    $region4: #{tpu_custom_call.1} parent=1 // pred_region
      %s18 = ssub.s32 512, 512
      %19 = vsyncadd [#allocation3], %s18
      %s20 = sshll.u32 [#allocation2], 4
      %s21 = int_to_ptr.vmem [resolvable:$true] %s20
      %26 = dma.hbm_to_vmem [thread:$0]  %s0, 512, %s21, [#allocation3], 64, 64, 4
    $region5: #{tpu_custom_call.1} parent=1 // pred_fallthru
      _
    // Predicated region
    $region6: #{tpu_custom_call.1} parent=1 // pred_check
      _
    $region7: #{tpu_custom_call.1} parent=1 // pred_check_branch
      %28 = sbr.rel (0) target = $region9
    $region8: #{tpu_custom_call.1} parent=1 // pred_region
      %s30 = ssub.s32 512, 512
      %31 = vsyncadd [#allocation6], %s30
      %s32 = sshll.u32 [#allocation5], 4
      %s33 = int_to_ptr.vmem [resolvable:$true] %s32
      %38 = dma.hbm_to_vmem [thread:$0]  %s1, 512, %s33, [#allocation6], 64, 64, 4
    $region9: #{tpu_custom_call.1} parent=1 // pred_fallthru
      _
    // Predicated region
    $region10: #{tpu_custom_call.1} parent=1 // pred_check
      _
    $region11: #{tpu_custom_call.1} parent=1 // pred_check_branch
      %40 = sbr.rel (0) target = $region13
    $region12: #{tpu_custom_call.1} parent=1 // pred_region
      %s42 = ssub.s32 4096, 4096
      %43 = vsyncadd [#allocation6], %s42
      %s44 = sshll.u32 [#allocation7], 4
      %s45 = int_to_ptr.vmem [resolvable:$true] %s44
      %50 = dma.hbm_to_vmem [thread:$0]  %s2, 4096, %s45, [#allocation6], 256, 256, 16
    $region13: #{tpu_custom_call.1} parent=1 // pred_fallthru
      _
    // Predicated region
    $region14: #{tpu_custom_call.1} parent=1 // pred_check
      _
    $region15: #{tpu_custom_call.1} parent=1 // pred_check_branch
      %52 = sbr.rel (0) target = $region17
    $region16: #{tpu_custom_call.1} parent=1 // pred_region
      _
    $region17: #{tpu_custom_call.1} parent=1 // pred_fallthru
      _
    // Predicated region
    $region18: #{tpu_custom_call.1} parent=1 // pred_check
      _
    $region19: #{tpu_custom_call.1} parent=1 // pred_check_branch
      %54 = sbr.rel (0) target = $region21
    $region20: #{tpu_custom_call.1} parent=1 // pred_region
      %s56 = ssub.s32 1024, 1024
      %57 = vsyncadd [#allocation9], %s56
      %s58 = sshll.u32 [#allocation8], 4
      %s59 = int_to_ptr.vmem [resolvable:$true] %s58
      %64 = dma.hbm_to_vmem [thread:$0]  %s4, 1024, %s59, [#allocation9], 64, 64, 4
    $region21: #{tpu_custom_call.1} parent=1 // pred_fallthru
      _
    // Predicated region
    $region22: #{tpu_custom_call.1} parent=1 // pred_check
      _
    $region23: #{tpu_custom_call.1} parent=1 // pred_check_branch
      %66 = sbr.rel (0) target = $region25
    $region24: #{tpu_custom_call.1} parent=1 // pred_region
      _
    $region25: #{tpu_custom_call.1} parent=1 // pred_fallthru
      _
    // Predicated region
    $region26: #{tpu_custom_call.1} parent=1 // pred_check
      _
    $region27: #{tpu_custom_call.1} parent=1 // pred_check_branch
      %68 = sbr.rel (0) target = $region29
    $region28: #{tpu_custom_call.1} parent=1 // pred_region
      %69 = dma.done [#allocation3], 512
    $region29: #{tpu_custom_call.1} parent=1 // pred_fallthru
      _
    // Predicated region
    $region30: #{tpu_custom_call.1} parent=1 // pred_check
      _
    $region31: #{tpu_custom_call.1} parent=1 // pred_check_branch
      %71 = sbr.rel (0) target = $region33
    $region32: #{tpu_custom_call.1} parent=1 // pred_region
      %72 = dma.done [#allocation6], 512
    $region33: #{tpu_custom_call.1} parent=1 // pred_fallthru
      _
    // Predicated region
    $region34: #{tpu_custom_call.1} parent=1 // pred_check
      _
    $region35: #{tpu_custom_call.1} parent=1 // pred_check_branch
      %74 = sbr.rel (0) target = $region37
    $region36: #{tpu_custom_call.1} parent=1 // pred_region
      %75 = dma.done [#allocation6], 4096
    $region37: #{tpu_custom_call.1} parent=1 // pred_fallthru
      _
    // Predicated region
    $region38: #{tpu_custom_call.1} parent=1 // pred_check
      _
    $region39: #{tpu_custom_call.1} parent=1 // pred_check_branch
      %77 = sbr.rel (0) target = $region41
    $region40: #{tpu_custom_call.1} parent=1 // pred_region
      %78 = dma.done [#allocation9], 1024
    $region41: #{tpu_custom_call.1} parent=1 // pred_fallthru
      _
    %v80 = vld [vmem:[#allocation2] sm:$0xf]
    %v81 = vld [vmem:[#allocation2 + $0x4] sm:$0xf]
    %v82 = vld [vmem:[#allocation2 + $0x8] sm:$0xf]
    %v83 = vld [vmem:[#allocation2 + $0xc] sm:$0xf]
    %v84 = vld [vmem:[#allocation2 + $0x10] sm:$0xf]
    %v85 = vld [vmem:[#allocation2 + $0x14] sm:$0xf]
    %v86 = vld [vmem:[#allocation2 + $0x18] sm:$0xf]
    %v87 = vld [vmem:[#allocation2 + $0x1c] sm:$0xf]
    %v88 = vld [vmem:[#allocation5] sm:$0xf]
    %v89 = vld [vmem:[#allocation5 + $0x4] sm:$0xf]
    %v90 = vld [vmem:[#allocation5 + $0x8] sm:$0xf]
    %v91 = vld [vmem:[#allocation5 + $0xc] sm:$0xf]
    %v92 = vld [vmem:[#allocation5 + $0x10] sm:$0xf]
    %v93 = vld [vmem:[#allocation5 + $0x14] sm:$0xf]
    %v94 = vld [vmem:[#allocation5 + $0x18] sm:$0xf]
    %v95 = vld [vmem:[#allocation5 + $0x1c] sm:$0xf]
    %v96 = vunpack.c.l.bf16 %v88
    %v97 = vunpack.c.l.bf16 %v89
    %v98 = vunpack.c.l.bf16 %v90
    %v99 = vunpack.c.l.bf16 %v91
    %v100 = vunpack.c.l.bf16 %v92
    %v101 = vunpack.c.l.bf16 %v93
    %v102 = vunpack.c.l.bf16 %v94
    %v103 = vunpack.c.l.bf16 %v95
    %v104 = vld [vmem:[#allocation7] sm:$0xff]
    %v105 = vld [vmem:[#allocation7 + $0x8] sm:$0xff]
    %v106 = vld [vmem:[#allocation7 + $0x10] sm:$0xff]
    %v107 = vld [vmem:[#allocation7 + $0x18] sm:$0xff]
    %v108 = vld [vmem:[#allocation7 + $0x20] sm:$0xff]
    %v109 = vld [vmem:[#allocation7 + $0x28] sm:$0xff]
    %v110 = vld [vmem:[#allocation7 + $0x30] sm:$0xff]
    %v111 = vld [vmem:[#allocation7 + $0x38] sm:$0xff]
    %v112 = vld [vmem:[#allocation7 + $0x40] sm:$0xff]
    %v113 = vld [vmem:[#allocation7 + $0x48] sm:$0xff]
    %v114 = vld [vmem:[#allocation7 + $0x50] sm:$0xff]
    %v115 = vld [vmem:[#allocation7 + $0x58] sm:$0xff]
    %v116 = vld [vmem:[#allocation7 + $0x60] sm:$0xff]
    %v117 = vld [vmem:[#allocation7 + $0x68] sm:$0xff]
    %v118 = vld [vmem:[#allocation7 + $0x70] sm:$0xff]
    %v119 = vld [vmem:[#allocation7 + $0x78] sm:$0xff]
    %v120 = vld [vmem:[#allocation7 + $0x80] sm:$0xff]
    %v121 = vld [vmem:[#allocation7 + $0x88] sm:$0xff]
    %v122 = vld [vmem:[#allocation7 + $0x90] sm:$0xff]
    %v123 = vld [vmem:[#allocation7 + $0x98] sm:$0xff]
    %v124 = vld [vmem:[#allocation7 + $0xa0] sm:$0xff]
    %v125 = vld [vmem:[#allocation7 + $0xa8] sm:$0xff]
    %v126 = vld [vmem:[#allocation7 + $0xb0] sm:$0xff]
    %v127 = vld [vmem:[#allocation7 + $0xb8] sm:$0xff]
    %v128 = vld [vmem:[#allocation7 + $0xc0] sm:$0xff]
    %v129 = vld [vmem:[#allocation7 + $0xc8] sm:$0xff]
    %v130 = vld [vmem:[#allocation7 + $0xd0] sm:$0xff]
    %v131 = vld [vmem:[#allocation7 + $0xd8] sm:$0xff]
    %v132 = vld [vmem:[#allocation7 + $0xe0] sm:$0xff]
    %v133 = vld [vmem:[#allocation7 + $0xe8] sm:$0xff]
    %v134 = vld [vmem:[#allocation7 + $0xf0] sm:$0xff]
    %v135 = vld [vmem:[#allocation7 + $0xf8] sm:$0xff]
    %v136 = vld [vmem:[%s3] sm:$0xf]
    %v138 = vlaneseq
    %v139 = vshrl.u32 %v138, 7
    %v140 = vsub.s32 0, %v139
    %v141 = vrot.slane %v136, %v140
    %v142 = vlaneseq
    %v143 = vshrl.u32 %v142, 7
    %v144 = vsub.s32 1, %v143
    %v145 = vrot.slane %v136, %v144
    %v146 = vlaneseq
    %v147 = vshrl.u32 %v146, 7
    %v148 = vsub.s32 2, %v147
    %v149 = vrot.slane %v136, %v148
    %v150 = vlaneseq
    %v151 = vshrl.u32 %v150, 7
    %v152 = vsub.s32 3, %v151
    %v153 = vrot.slane %v136, %v152
    %v166 = vunpack.c.l.b16 %v80
    %v167 = vunpack.c.l.b16 %v81
    %v168 = vunpack.c.l.b16 %v82
    %v169 = vunpack.c.l.b16 %v83
    %v170 = vunpack.c.l.b16 %v84
    %v171 = vunpack.c.l.b16 %v85
    %v172 = vunpack.c.l.b16 %v86
    %v173 = vunpack.c.l.b16 %v87
    %v174 = vpack.c.b16 %v167, %v166
    %v175 = vpack.c.b16 %v169, %v168
    %v176 = vpack.c.b16 %v171, %v170
    %v177 = vpack.c.b16 %v173, %v172
    %v214 = vunpack.c.l.b16 %v104
    %v215 = vunpack.c.h.b16 %v104
    %v216 = vunpack.c.l.b16 %v105
    %v217 = vunpack.c.h.b16 %v105
    %v218 = vunpack.c.l.b16 %v106
    %v219 = vunpack.c.h.b16 %v106
    %v220 = vunpack.c.l.b16 %v107
    %v221 = vunpack.c.h.b16 %v107
    %v222 = vunpack.c.l.b16 %v108
    %v223 = vunpack.c.h.b16 %v108
    %v224 = vunpack.c.l.b16 %v109
    %v225 = vunpack.c.h.b16 %v109
    %v226 = vunpack.c.l.b16 %v110
    %v227 = vunpack.c.h.b16 %v110
    %v228 = vunpack.c.l.b16 %v111
    %v229 = vunpack.c.h.b16 %v111
    %v230 = vunpack.c.l.b16 %v112
    %v231 = vunpack.c.h.b16 %v112
    %v232 = vunpack.c.l.b16 %v113
    %v233 = vunpack.c.h.b16 %v113
    %v234 = vunpack.c.l.b16 %v114
    %v235 = vunpack.c.h.b16 %v114
    %v236 = vunpack.c.l.b16 %v115
    %v237 = vunpack.c.h.b16 %v115
    %v238 = vunpack.c.l.b16 %v116
    %v239 = vunpack.c.h.b16 %v116
    %v240 = vunpack.c.l.b16 %v117
    %v241 = vunpack.c.h.b16 %v117
    %v242 = vunpack.c.l.b16 %v118
    %v243 = vunpack.c.h.b16 %v118
    %v244 = vunpack.c.l.b16 %v119
    %v245 = vunpack.c.h.b16 %v119
    %v246 = vunpack.c.l.b16 %v120
    %v247 = vunpack.c.h.b16 %v120
    %v248 = vunpack.c.l.b16 %v121
    %v249 = vunpack.c.h.b16 %v121
    %v250 = vunpack.c.l.b16 %v122
    %v251 = vunpack.c.h.b16 %v122
    %v252 = vunpack.c.l.b16 %v123
    %v253 = vunpack.c.h.b16 %v123
    %v254 = vunpack.c.l.b16 %v124
    %v255 = vunpack.c.h.b16 %v124
    %v256 = vunpack.c.l.b16 %v125
    %v257 = vunpack.c.h.b16 %v125
    %v258 = vunpack.c.l.b16 %v126
    %v259 = vunpack.c.h.b16 %v126
    %v260 = vunpack.c.l.b16 %v127
    %v261 = vunpack.c.h.b16 %v127
    %v262 = vunpack.c.l.b16 %v128
    %v263 = vunpack.c.h.b16 %v128
    %v264 = vunpack.c.l.b16 %v129
    %v265 = vunpack.c.h.b16 %v129
    %v266 = vunpack.c.l.b16 %v130
    %v267 = vunpack.c.h.b16 %v130
    %v268 = vunpack.c.l.b16 %v131
    %v269 = vunpack.c.h.b16 %v131
    %v270 = vunpack.c.l.b16 %v132
    %v271 = vunpack.c.h.b16 %v132
    %v272 = vunpack.c.l.b16 %v133
    %v273 = vunpack.c.h.b16 %v133
    %v274 = vunpack.c.l.b16 %v134
    %v275 = vunpack.c.h.b16 %v134
    %v276 = vunpack.c.l.b16 %v135
    %v277 = vunpack.c.h.b16 %v135
    %v278 = vpack.c.b16 %v218, %v214
    %v279 = vpack.c.b16 %v219, %v215
    %v280 = vpack.c.b16 %v220, %v216
    %v281 = vpack.c.b16 %v221, %v217
    %v282 = vpack.c.b16 %v226, %v222
    %v283 = vpack.c.b16 %v227, %v223
    %v284 = vpack.c.b16 %v228, %v224
    %v285 = vpack.c.b16 %v229, %v225
    %v286 = vpack.c.b16 %v234, %v230
    %v287 = vpack.c.b16 %v235, %v231
    %v288 = vpack.c.b16 %v236, %v232
    %v289 = vpack.c.b16 %v237, %v233
    %v290 = vpack.c.b16 %v242, %v238
    %v291 = vpack.c.b16 %v243, %v239
    %v292 = vpack.c.b16 %v244, %v240
    %v293 = vpack.c.b16 %v245, %v241
    %v294 = vpack.c.b16 %v250, %v246
    %v295 = vpack.c.b16 %v251, %v247
    %v296 = vpack.c.b16 %v252, %v248
    %v297 = vpack.c.b16 %v253, %v249
    %v298 = vpack.c.b16 %v258, %v254
    %v299 = vpack.c.b16 %v259, %v255
    %v300 = vpack.c.b16 %v260, %v256
    %v301 = vpack.c.b16 %v261, %v257
    %v302 = vpack.c.b16 %v266, %v262
    %v303 = vpack.c.b16 %v267, %v263
    %v304 = vpack.c.b16 %v268, %v264
    %v305 = vpack.c.b16 %v269, %v265
    %v306 = vpack.c.b16 %v274, %v270
    %v307 = vpack.c.b16 %v275, %v271
    %v308 = vpack.c.b16 %v276, %v272
    %v309 = vpack.c.b16 %v277, %v273
    %342 = vmatprep.subr.bf16.mxu0 %v307
    %343 = vmatpush1.bf16.msra.mxu0 %v306
    %344 = vmatprep.subr.bf16.mxu0 %v303
    %345 = vmatpush1.bf16.msra.mxu0 %v302
    %346 = vmatprep.subr.bf16.mxu0 %v299
    %347 = vmatpush1.bf16.msra.mxu0 %v298
    %348 = vmatprep.subr.bf16.mxu0 %v295
    %349 = vmatpush1.bf16.msra.mxu0 %v294
    %350 = vmatprep.subr.bf16.mxu0 %v291
    %351 = vmatpush1.bf16.msra.mxu0 %v290
    %352 = vmatprep.subr.bf16.mxu0 %v287
    %353 = vmatpush1.bf16.msra.mxu0 %v286
    %354 = vmatprep.subr.bf16.mxu0 %v283
    %355 = vmatpush1.bf16.msra.mxu0 %v282
    %356 = vmatprep.subr.bf16.mxu0 %v279
    %357 = vmatpush1.bf16.msra.mxu0 %v278
    %358 = vmatprep.subr.bf16.mxu0 0
    %359 = vmatpush2.bf16.msra.mxu0 0
    %360 = vmatprep.subr.bf16.mxu0 0
    %361 = vmatpush2.bf16.msra.mxu0 0
    %362 = vmatprep.subr.bf16.mxu0 0
    %363 = vmatpush2.bf16.msra.mxu0 0
    %364 = vmatprep.subr.bf16.mxu0 0
    %365 = vmatpush2.bf16.msra.mxu0 0
    %366 = vmatprep.subr.bf16.mxu0 0
    %367 = vmatpush2.bf16.msra.mxu0 0
    %368 = vmatprep.subr.bf16.mxu0 0
    %369 = vmatpush2.bf16.msra.mxu0 0
    %370 = vmatprep.subr.bf16.mxu0 0
    %371 = vmatpush2.bf16.msra.mxu0 0
    %372 = vmatprep.subr.bf16.mxu0 0
    %373 = vmatpush2.bf16.msra.mxu0 0
    %374 = vmatprep.mubr.bf16.mxu0 0
    %375 = vmatmul.mubr.bf16.gmra.mxu0 %v174
    %v376 = vpop.f32.mrf.mxu0
    %v377 = vadd.f32 %v141, %v376
    %v378 = vpop.f32.mrf.mxu0
    %v379 = vadd.f32 %v145, %v378
    %v380 = vpop.f32.mrf.mxu0
    %v381 = vadd.f32 %v141, %v380
    %v382 = vpop.f32.mrf.mxu0
    %v383 = vadd.f32 %v145, %v382
    %384 = vmatprep.mubr.bf16.mxu0 0
    %385 = vmatmul.mubr.bf16.gmra.mxu0 %v175
    %v386 = vpop.f32.mrf.mxu0
    %v387 = vadd.f32 %v141, %v386
    %v388 = vpop.f32.mrf.mxu0
    %v389 = vadd.f32 %v145, %v388
    %v390 = vpop.f32.mrf.mxu0
    %v391 = vadd.f32 %v141, %v390
    %v392 = vpop.f32.mrf.mxu0
    %v393 = vadd.f32 %v145, %v392
    %394 = vmatprep.mubr.bf16.mxu0 0
    %395 = vmatmul.mubr.bf16.gmra.mxu0 %v176
    %v396 = vpop.f32.mrf.mxu0
    %v397 = vadd.f32 %v141, %v396
    %v398 = vpop.f32.mrf.mxu0
    %v399 = vadd.f32 %v145, %v398
    %v400 = vpop.f32.mrf.mxu0
    %v401 = vadd.f32 %v141, %v400
    %v402 = vpop.f32.mrf.mxu0
    %v403 = vadd.f32 %v145, %v402
    %404 = vmatprep.mubr.bf16.mxu0 0
    %405 = vmatmul.mubr.bf16.gmra.mxu0 %v177
    %v406 = vpop.f32.mrf.mxu0
    %v407 = vadd.f32 %v141, %v406
    %v408 = vpop.f32.mrf.mxu0
    %v409 = vadd.f32 %v145, %v408
    %v410 = vpop.f32.mrf.mxu0
    %v411 = vadd.f32 %v141, %v410
    %v412 = vpop.f32.mrf.mxu0
    %v413 = vadd.f32 %v145, %v412
    %414 = vdwg.mxu0
    %415 = vmatprep.subr.bf16.mxu0 %v309
    %416 = vmatpush1.bf16.msra.mxu0 %v308
    %417 = vmatprep.subr.bf16.mxu0 %v305
    %418 = vmatpush1.bf16.msra.mxu0 %v304
    %419 = vmatprep.subr.bf16.mxu0 %v301
    %420 = vmatpush1.bf16.msra.mxu0 %v300
    %421 = vmatprep.subr.bf16.mxu0 %v297
    %422 = vmatpush1.bf16.msra.mxu0 %v296
    %423 = vmatprep.subr.bf16.mxu0 %v293
    %424 = vmatpush1.bf16.msra.mxu0 %v292
    %425 = vmatprep.subr.bf16.mxu0 %v289
    %426 = vmatpush1.bf16.msra.mxu0 %v288
    %427 = vmatprep.subr.bf16.mxu0 %v285
    %428 = vmatpush1.bf16.msra.mxu0 %v284
    %429 = vmatprep.subr.bf16.mxu0 %v281
    %430 = vmatpush1.bf16.msra.mxu0 %v280
    %431 = vmatprep.subr.bf16.mxu0 0
    %432 = vmatpush2.bf16.msra.mxu0 0
    %433 = vmatprep.subr.bf16.mxu0 0
    %434 = vmatpush2.bf16.msra.mxu0 0
    %435 = vmatprep.subr.bf16.mxu0 0
    %436 = vmatpush2.bf16.msra.mxu0 0
    %437 = vmatprep.subr.bf16.mxu0 0
    %438 = vmatpush2.bf16.msra.mxu0 0
    %439 = vmatprep.subr.bf16.mxu0 0
    %440 = vmatpush2.bf16.msra.mxu0 0
    %441 = vmatprep.subr.bf16.mxu0 0
    %442 = vmatpush2.bf16.msra.mxu0 0
    %443 = vmatprep.subr.bf16.mxu0 0
    %444 = vmatpush2.bf16.msra.mxu0 0
    %445 = vmatprep.subr.bf16.mxu0 0
    %446 = vmatpush2.bf16.msra.mxu0 0
    %447 = vmatprep.mubr.bf16.mxu0 0
    %448 = vmatmul.mubr.bf16.gmra.mxu0 %v174
    %v449 = vpop.f32.mrf.mxu0
    %v450 = vadd.f32 %v149, %v449
    %v451 = vpop.f32.mrf.mxu0
    %v452 = vadd.f32 %v153, %v451
    %v453 = vpop.f32.mrf.mxu0
    %v454 = vadd.f32 %v149, %v453
    %v455 = vpop.f32.mrf.mxu0
    %v456 = vadd.f32 %v153, %v455
    %457 = vmatprep.mubr.bf16.mxu0 0
    %458 = vmatmul.mubr.bf16.gmra.mxu0 %v175
    %v459 = vpop.f32.mrf.mxu0
    %v460 = vadd.f32 %v149, %v459
    %v461 = vpop.f32.mrf.mxu0
    %v462 = vadd.f32 %v153, %v461
    %v463 = vpop.f32.mrf.mxu0
    %v464 = vadd.f32 %v149, %v463
    %v465 = vpop.f32.mrf.mxu0
    %v466 = vadd.f32 %v153, %v465
    %467 = vmatprep.mubr.bf16.mxu0 0
    %468 = vmatmul.mubr.bf16.gmra.mxu0 %v176
    %v469 = vpop.f32.mrf.mxu0
    %v470 = vadd.f32 %v149, %v469
    %v471 = vpop.f32.mrf.mxu0
    %v472 = vadd.f32 %v153, %v471
    %v473 = vpop.f32.mrf.mxu0
    %v474 = vadd.f32 %v149, %v473
    %v475 = vpop.f32.mrf.mxu0
    %v476 = vadd.f32 %v153, %v475
    %477 = vmatprep.mubr.bf16.mxu0 0
    %478 = vmatmul.mubr.bf16.gmra.mxu0 %v177
    %v479 = vpop.f32.mrf.mxu0
    %v480 = vadd.f32 %v149, %v479
    %v481 = vpop.f32.mrf.mxu0
    %v482 = vadd.f32 %v153, %v481
    %v483 = vpop.f32.mrf.mxu0
    %v484 = vadd.f32 %v149, %v483
    %v485 = vpop.f32.mrf.mxu0
    %v486 = vadd.f32 %v153, %v485
    %487 = vdwg.mxu0
    %v488 = vpack.c.bf16 %v381, %v377
    %v489 = vpack.c.bf16 %v391, %v387
    %v490 = vpack.c.bf16 %v401, %v397
    %v491 = vpack.c.bf16 %v411, %v407
    %v492 = vpack.c.bf16 %v383, %v379
    %v493 = vpack.c.bf16 %v393, %v389
    %v494 = vpack.c.bf16 %v403, %v399
    %v495 = vpack.c.bf16 %v413, %v409
    %v496 = vpack.c.bf16 %v454, %v450
    %v497 = vpack.c.bf16 %v456, %v452
    %v498 = vpack.c.bf16 %v464, %v460
    %v499 = vpack.c.bf16 %v466, %v462
    %v500 = vpack.c.bf16 %v474, %v470
    %v501 = vpack.c.bf16 %v476, %v472
    %v502 = vpack.c.bf16 %v484, %v480
    %v503 = vpack.c.bf16 %v486, %v482
    %vm504 = vcmask 261120
    %v506 = vsel %vm504, %v488, 0
    %v509 = vsel %vm504, %v489, 0
    %v512 = vsel %vm504, %v490, 0
    %v515 = vsel %vm504, %v491, 0
    %v518 = vsel %vm504, %v492, 0
    %v521 = vsel %vm504, %v493, 0
    %v524 = vsel %vm504, %v494, 0
    %v527 = vsel %vm504, %v495, 0
    %529 = vmatprep.subr.bf16.mxu0 0
    %530 = vmatpush1.bf16.xpose.msra.mxu0 0
    %531 = vmatprep.subr.bf16.mxu0 0
    %532 = vmatpush1.bf16.xpose.msra.mxu0 0
    %533 = vmatprep.subr.bf16.mxu0 0
    %534 = vmatpush1.bf16.xpose.msra.mxu0 0
    %535 = vmatprep.subr.bf16.mxu0 0
    %536 = vmatpush1.bf16.xpose.msra.mxu0 0
    %537 = vmatprep.subr.bf16.mxu0 0
    %538 = vmatpush1.bf16.xpose.msra.mxu0 %v527
    %539 = vmatprep.subr.bf16.mxu0 0
    %540 = vmatpush1.bf16.xpose.msra.mxu0 %v524
    %541 = vmatprep.subr.bf16.mxu0 0
    %542 = vmatpush1.bf16.xpose.msra.mxu0 %v521
    %543 = vmatprep.subr.bf16.mxu0 0
    %544 = vmatpush1.bf16.xpose.msra.mxu0 %v518
    %545 = vmatprep.subr.bf16.mxu0 0
    %546 = vmatpush2.bf16.xpose.msra.mxu0 0
    %547 = vmatprep.subr.bf16.mxu0 0
    %548 = vmatpush2.bf16.xpose.msra.mxu0 0
    %549 = vmatprep.subr.bf16.mxu0 0
    %550 = vmatpush2.bf16.xpose.msra.mxu0 0
    %551 = vmatprep.subr.bf16.mxu0 0
    %552 = vmatpush2.bf16.xpose.msra.mxu0 0
    %553 = vmatprep.subr.bf16.mxu0 0
    %554 = vmatpush2.bf16.xpose.msra.mxu0 0
    %555 = vmatprep.subr.bf16.mxu0 0
    %556 = vmatpush2.bf16.xpose.msra.mxu0 0
    %557 = vmatprep.subr.bf16.mxu0 0
    %558 = vmatpush2.bf16.xpose.msra.mxu0 0
    %559 = vmatprep.subr.bf16.mxu0 0
    %560 = vmatpush2.bf16.xpose.msra.mxu0 0
    %561 = vmatprep.mubr.bf16.mxu0 0
    %562 = vmatmul.mubr.bf16.gmra.mxu0 %v506
    %v563 = vpop.f32.mrf.mxu0
    %v564 = vadd.f32 %v96, %v563
    %v565 = vpop.f32.mrf.mxu0
    %v566 = vpop.f32.mrf.mxu0
    %v567 = vadd.f32 %v97, %v566
    %v568 = vpop.f32.mrf.mxu0
    %569 = vmatprep.mubr.bf16.mxu0 0
    %570 = vmatmul.mubr.bf16.gmra.mxu0 %v509
    %v571 = vpop.f32.mrf.mxu0
    %v572 = vadd.f32 %v98, %v571
    %v573 = vpop.f32.mrf.mxu0
    %v574 = vpop.f32.mrf.mxu0
    %v575 = vadd.f32 %v99, %v574
    %v576 = vpop.f32.mrf.mxu0
    %577 = vmatprep.mubr.bf16.mxu0 0
    %578 = vmatmul.mubr.bf16.gmra.mxu0 %v512
    %v579 = vpop.f32.mrf.mxu0
    %v580 = vadd.f32 %v100, %v579
    %v581 = vpop.f32.mrf.mxu0
    %v582 = vpop.f32.mrf.mxu0
    %v583 = vadd.f32 %v101, %v582
    %v584 = vpop.f32.mrf.mxu0
    %585 = vmatprep.mubr.bf16.mxu0 0
    %586 = vmatmul.mubr.bf16.gmra.mxu0 %v515
    %v587 = vpop.f32.mrf.mxu0
    %v588 = vadd.f32 %v102, %v587
    %v589 = vpop.f32.mrf.mxu0
    %v590 = vpop.f32.mrf.mxu0
    %v591 = vadd.f32 %v103, %v590
    %v592 = vpop.f32.mrf.mxu0
    %593 = vdwg.mxu0
    %vm594 = vcmask 523264
    %v595 = vsel %vm594, %v564, -inf
    %596 = vmax.xlane.f32.xlu0 %v595
    %v597 = vpop.xlane.xlu0 %596
    %v598 = vsel %vm594, %v567, -inf
    %599 = vmax.xlane.f32.xlu0 %v598
    %v600 = vpop.xlane.xlu0 %599
    %v601 = vsel %vm594, %v572, -inf
    %602 = vmax.xlane.f32.xlu0 %v601
    %v603 = vpop.xlane.xlu0 %602
    %v604 = vsel %vm594, %v575, -inf
    %605 = vmax.xlane.f32.xlu0 %v604
    %v606 = vpop.xlane.xlu0 %605
    %v607 = vsel %vm594, %v580, -inf
    %608 = vmax.xlane.f32.xlu0 %v607
    %v609 = vpop.xlane.xlu0 %608
    %v610 = vsel %vm594, %v583, -inf
    %611 = vmax.xlane.f32.xlu0 %v610
    %v612 = vpop.xlane.xlu0 %611
    %v613 = vsel %vm594, %v588, -inf
    %614 = vmax.xlane.f32.xlu0 %v613
    %v615 = vpop.xlane.xlu0 %614
    %v616 = vsel %vm594, %v591, -inf
    %617 = vmax.xlane.f32.xlu0 %v616
    %v618 = vpop.xlane.xlu0 %617
    %v619 = vsub.f32 %v564, %v597
    %v620 = vsub.f32 %v567, %v600
    %v621 = vsub.f32 %v572, %v603
    %v622 = vsub.f32 %v575, %v606
    %v623 = vsub.f32 %v580, %v609
    %v624 = vsub.f32 %v583, %v612
    %v625 = vsub.f32 %v588, %v615
    %v626 = vsub.f32 %v591, %v618
    %v627 = vmul.f32 %v619, 1.442695
    %v628 = vpow.pop %v627
    %v629 = vmul.f32 %v620, 1.442695
    %v630 = vpow.pop %v629
    %v631 = vmul.f32 %v621, 1.442695
    %v632 = vpow.pop %v631
    %v633 = vmul.f32 %v622, 1.442695
    %v634 = vpow.pop %v633
    %v635 = vmul.f32 %v623, 1.442695
    %v636 = vpow.pop %v635
    %v637 = vmul.f32 %v624, 1.442695
    %v638 = vpow.pop %v637
    %v639 = vmul.f32 %v625, 1.442695
    %v640 = vpow.pop %v639
    %v641 = vmul.f32 %v626, 1.442695
    %v642 = vpow.pop %v641
    %v643 = vsel %vm594, %v628, 0.0
    %644 = vadd.xlane.f32.xlu0 %v643
    %v645 = vpop.xlane.xlu0 %644
    %v646 = vsel %vm594, %v630, 0.0
    %647 = vadd.xlane.f32.xlu0 %v646
    %v648 = vpop.xlane.xlu0 %647
    %v649 = vsel %vm594, %v632, 0.0
    %650 = vadd.xlane.f32.xlu0 %v649
    %v651 = vpop.xlane.xlu0 %650
    %v652 = vsel %vm594, %v634, 0.0
    %653 = vadd.xlane.f32.xlu0 %v652
    %v654 = vpop.xlane.xlu0 %653
    %v655 = vsel %vm594, %v636, 0.0
    %656 = vadd.xlane.f32.xlu0 %v655
    %v657 = vpop.xlane.xlu0 %656
    %v658 = vsel %vm594, %v638, 0.0
    %659 = vadd.xlane.f32.xlu0 %v658
    %v660 = vpop.xlane.xlu0 %659
    %v661 = vsel %vm594, %v640, 0.0
    %662 = vadd.xlane.f32.xlu0 %v661
    %v663 = vpop.xlane.xlu0 %662
    %v664 = vsel %vm594, %v642, 0.0
    %665 = vadd.xlane.f32.xlu0 %v664
    %v666 = vpop.xlane.xlu0 %665
    %v667 = vrcp.pop %v645
    %v668 = vrcp.pop %v648
    %v669 = vrcp.pop %v651
    %v670 = vrcp.pop %v654
    %v671 = vrcp.pop %v657
    %v672 = vrcp.pop %v660
    %v673 = vrcp.pop %v663
    %v674 = vrcp.pop %v666
    %v675 = vmul.f32 %v628, %v667
    %v676 = vmul.f32 %v630, %v668
    %v677 = vmul.f32 %v632, %v669
    %v678 = vmul.f32 %v634, %v670
    %v679 = vmul.f32 %v636, %v671
    %v680 = vmul.f32 %v638, %v672
    %v681 = vmul.f32 %v640, %v673
    %v682 = vmul.f32 %v642, %v674
    %v683 = vpack.c.bf16 %v676, %v675
    %v684 = vpack.c.bf16 %v678, %v677
    %v685 = vpack.c.bf16 %v680, %v679
    %v686 = vpack.c.bf16 %v682, %v681
    %v688 = vsel %vm594, %v683, 0
    %v691 = vsel %vm594, %v684, 0
    %v694 = vsel %vm594, %v685, 0
    %v697 = vsel %vm594, %v686, 0
    %699 = vmatprep.subr.bf16.mxu0 0
    %700 = vmatpush1.bf16.msra.mxu0 0
    %701 = vmatprep.subr.bf16.mxu0 0
    %702 = vmatpush1.bf16.msra.mxu0 0
    %703 = vmatprep.subr.bf16.mxu0 0
    %704 = vmatpush1.bf16.msra.mxu0 0
    %705 = vmatprep.subr.bf16.mxu0 0
    %706 = vmatpush1.bf16.msra.mxu0 0
    %707 = vmatprep.subr.bf16.mxu0 0
    %708 = vmatpush1.bf16.msra.mxu0 %v502
    %709 = vmatprep.subr.bf16.mxu0 0
    %710 = vmatpush1.bf16.msra.mxu0 %v500
    %711 = vmatprep.subr.bf16.mxu0 0
    %712 = vmatpush1.bf16.msra.mxu0 %v498
    %713 = vmatprep.subr.bf16.mxu0 0
    %714 = vmatpush1.bf16.msra.mxu0 %v496
    %715 = vmatprep.subr.bf16.mxu0 0
    %716 = vmatpush2.bf16.msra.mxu0 0
    %717 = vmatprep.subr.bf16.mxu0 0
    %718 = vmatpush2.bf16.msra.mxu0 0
    %719 = vmatprep.subr.bf16.mxu0 0
    %720 = vmatpush2.bf16.msra.mxu0 0
    %721 = vmatprep.subr.bf16.mxu0 0
    %722 = vmatpush2.bf16.msra.mxu0 0
    %723 = vmatprep.subr.bf16.mxu0 0
    %724 = vmatpush2.bf16.msra.mxu0 0
    %725 = vmatprep.subr.bf16.mxu0 0
    %726 = vmatpush2.bf16.msra.mxu0 0
    %727 = vmatprep.subr.bf16.mxu0 0
    %728 = vmatpush2.bf16.msra.mxu0 0
    %729 = vmatprep.subr.bf16.mxu0 0
    %730 = vmatpush2.bf16.msra.mxu0 0
    %731 = vmatprep.mubr.bf16.mxu0 0
    %732 = vmatmul.mubr.bf16.gmra.mxu0 %v688
    %v733 = vpop.f32.mrf.mxu0
    %v734 = vadd.f32 0.0, %v733
    %v735 = vpop.f32.mrf.mxu0
    %v736 = vpop.f32.mrf.mxu0
    %v737 = vadd.f32 0.0, %v736
    %v738 = vpop.f32.mrf.mxu0
    %739 = vmatprep.mubr.bf16.mxu0 0
    %740 = vmatmul.mubr.bf16.gmra.mxu0 %v691
    %v741 = vpop.f32.mrf.mxu0
    %v742 = vadd.f32 0.0, %v741
    %v743 = vpop.f32.mrf.mxu0
    %v744 = vpop.f32.mrf.mxu0
    %v745 = vadd.f32 0.0, %v744
    %v746 = vpop.f32.mrf.mxu0
    %747 = vmatprep.mubr.bf16.mxu0 0
    %748 = vmatmul.mubr.bf16.gmra.mxu0 %v694
    %v749 = vpop.f32.mrf.mxu0
    %v750 = vadd.f32 0.0, %v749
    %v751 = vpop.f32.mrf.mxu0
    %v752 = vpop.f32.mrf.mxu0
    %v753 = vadd.f32 0.0, %v752
    %v754 = vpop.f32.mrf.mxu0
    %755 = vmatprep.mubr.bf16.mxu0 0
    %756 = vmatmul.mubr.bf16.gmra.mxu0 %v697
    %v757 = vpop.f32.mrf.mxu0
    %v758 = vadd.f32 0.0, %v757
    %v759 = vpop.f32.mrf.mxu0
    %v760 = vpop.f32.mrf.mxu0
    %v761 = vadd.f32 0.0, %v760
    %v762 = vpop.f32.mrf.mxu0
    %763 = vdwg.mxu0
    %v764 = vxor.u32 %v734, 2147483648
    %v765 = vxor.u32 %v737, 2147483648
    %v766 = vxor.u32 %v742, 2147483648
    %v767 = vxor.u32 %v745, 2147483648
    %v768 = vxor.u32 %v750, 2147483648
    %v769 = vxor.u32 %v753, 2147483648
    %v770 = vxor.u32 %v758, 2147483648
    %v771 = vxor.u32 %v761, 2147483648
    %v772 = vmul.f32 %v764, 1.442695
    %v773 = vpow.pop %v772
    %v774 = vmul.f32 %v765, 1.442695
    %v775 = vpow.pop %v774
    %v776 = vmul.f32 %v766, 1.442695
    %v777 = vpow.pop %v776
    %v778 = vmul.f32 %v767, 1.442695
    %v779 = vpow.pop %v778
    %v780 = vmul.f32 %v768, 1.442695
    %v781 = vpow.pop %v780
    %v782 = vmul.f32 %v769, 1.442695
    %v783 = vpow.pop %v782
    %v784 = vmul.f32 %v770, 1.442695
    %v785 = vpow.pop %v784
    %v786 = vmul.f32 %v771, 1.442695
    %v787 = vpow.pop %v786
    %v788 = vadd.f32 %v773, 1.0
    %v789 = vadd.f32 %v775, 1.0
    %v790 = vadd.f32 %v777, 1.0
    %v791 = vadd.f32 %v779, 1.0
    %v792 = vadd.f32 %v781, 1.0
    %v793 = vadd.f32 %v783, 1.0
    %v794 = vadd.f32 %v785, 1.0
    %v795 = vadd.f32 %v787, 1.0
    %v796 = vrcp.pop %v788
    %v797 = vmul.f32 1.0, %v796
    %v798 = vrcp.pop %v789
    %v799 = vmul.f32 1.0, %v798
    %v800 = vrcp.pop %v790
    %v801 = vmul.f32 1.0, %v800
    %v802 = vrcp.pop %v791
    %v803 = vmul.f32 1.0, %v802
    %v804 = vrcp.pop %v792
    %v805 = vmul.f32 1.0, %v804
    %v806 = vrcp.pop %v793
    %v807 = vmul.f32 1.0, %v806
    %v808 = vrcp.pop %v794
    %v809 = vmul.f32 1.0, %v808
    %v810 = vrcp.pop %v795
    %v811 = vmul.f32 1.0, %v810
    %v812 = vmul.f32 %v734, %v797
    %v813 = vmul.f32 %v737, %v799
    %v814 = vmul.f32 %v742, %v801
    %v815 = vmul.f32 %v745, %v803
    %v816 = vmul.f32 %v750, %v805
    %v817 = vmul.f32 %v753, %v807
    %v818 = vmul.f32 %v758, %v809
    %v819 = vmul.f32 %v761, %v811
    %828 = vrot.lane.b32.xlu0 %v734, 32
    %v829 = vpop.permute.xlu0 %828
    %830 = vrot.lane.b32.xlu0 %v737, 32
    %v831 = vpop.permute.xlu0 %830
    %832 = vrot.lane.b32.xlu0 %v742, 32
    %v833 = vpop.permute.xlu0 %832
    %834 = vrot.lane.b32.xlu0 %v745, 32
    %v835 = vpop.permute.xlu0 %834
    %836 = vrot.lane.b32.xlu0 %v750, 32
    %v837 = vpop.permute.xlu0 %836
    %838 = vrot.lane.b32.xlu0 %v753, 32
    %v839 = vpop.permute.xlu0 %838
    %840 = vrot.lane.b32.xlu0 %v758, 32
    %v841 = vpop.permute.xlu0 %840
    %842 = vrot.lane.b32.xlu0 %v761, 32
    %v843 = vpop.permute.xlu0 %842
    %v852 = vmul.f32 %v812, %v829
    %v853 = vmul.f32 %v813, %v831
    %v854 = vmul.f32 %v814, %v833
    %v855 = vmul.f32 %v815, %v835
    %v856 = vmul.f32 %v816, %v837
    %v857 = vmul.f32 %v817, %v839
    %v858 = vmul.f32 %v818, %v841
    %v859 = vmul.f32 %v819, %v843
    %864 = vrot.lane.b32.xlu0 %v488, 96
    %v865 = vpop.permute.xlu0 %864
    %866 = vrot.lane.b32.xlu0 %v489, 96
    %v867 = vpop.permute.xlu0 %866
    %868 = vrot.lane.b32.xlu0 %v490, 96
    %v869 = vpop.permute.xlu0 %868
    %870 = vrot.lane.b32.xlu0 %v491, 96
    %v871 = vpop.permute.xlu0 %870
    %876 = vrot.lane.b32.xlu0 %v492, 96
    %v877 = vpop.permute.xlu0 %876
    %878 = vrot.lane.b32.xlu0 %v493, 96
    %v879 = vpop.permute.xlu0 %878
    %880 = vrot.lane.b32.xlu0 %v494, 96
    %v881 = vpop.permute.xlu0 %880
    %882 = vrot.lane.b32.xlu0 %v495, 96
    %v883 = vpop.permute.xlu0 %882
    %v885 = vsel %vm504, %v865, 0
    %v888 = vsel %vm504, %v867, 0
    %v891 = vsel %vm504, %v869, 0
    %v894 = vsel %vm504, %v871, 0
    %v897 = vsel %vm504, %v877, 0
    %v900 = vsel %vm504, %v879, 0
    %v903 = vsel %vm504, %v881, 0
    %v906 = vsel %vm504, %v883, 0
    %908 = vmatprep.subr.bf16.mxu0 0
    %909 = vmatpush1.bf16.xpose.msra.mxu0 0
    %910 = vmatprep.subr.bf16.mxu0 0
    %911 = vmatpush1.bf16.xpose.msra.mxu0 0
    %912 = vmatprep.subr.bf16.mxu0 0
    %913 = vmatpush1.bf16.xpose.msra.mxu0 0
    %914 = vmatprep.subr.bf16.mxu0 0
    %915 = vmatpush1.bf16.xpose.msra.mxu0 0
    %916 = vmatprep.subr.bf16.mxu0 0
    %917 = vmatpush1.bf16.xpose.msra.mxu0 %v906
    %918 = vmatprep.subr.bf16.mxu0 0
    %919 = vmatpush1.bf16.xpose.msra.mxu0 %v903
    %920 = vmatprep.subr.bf16.mxu0 0
    %921 = vmatpush1.bf16.xpose.msra.mxu0 %v900
    %922 = vmatprep.subr.bf16.mxu0 0
    %923 = vmatpush1.bf16.xpose.msra.mxu0 %v897
    %924 = vmatprep.subr.bf16.mxu0 0
    %925 = vmatpush2.bf16.xpose.msra.mxu0 0
    %926 = vmatprep.subr.bf16.mxu0 0
    %927 = vmatpush2.bf16.xpose.msra.mxu0 0
    %928 = vmatprep.subr.bf16.mxu0 0
    %929 = vmatpush2.bf16.xpose.msra.mxu0 0
    %930 = vmatprep.subr.bf16.mxu0 0
    %931 = vmatpush2.bf16.xpose.msra.mxu0 0
    %932 = vmatprep.subr.bf16.mxu0 0
    %933 = vmatpush2.bf16.xpose.msra.mxu0 0
    %934 = vmatprep.subr.bf16.mxu0 0
    %935 = vmatpush2.bf16.xpose.msra.mxu0 0
    %936 = vmatprep.subr.bf16.mxu0 0
    %937 = vmatpush2.bf16.xpose.msra.mxu0 0
    %938 = vmatprep.subr.bf16.mxu0 0
    %939 = vmatpush2.bf16.xpose.msra.mxu0 0
    %940 = vmatprep.mubr.bf16.mxu0 0
    %941 = vmatmul.mubr.bf16.gmra.mxu0 %v885
    %v942 = vpop.f32.mrf.mxu0
    %v943 = vadd.f32 %v96, %v942
    %v944 = vpop.f32.mrf.mxu0
    %v945 = vpop.f32.mrf.mxu0
    %v946 = vadd.f32 %v97, %v945
    %v947 = vpop.f32.mrf.mxu0
    %948 = vmatprep.mubr.bf16.mxu0 0
    %949 = vmatmul.mubr.bf16.gmra.mxu0 %v888
    %v950 = vpop.f32.mrf.mxu0
    %v951 = vadd.f32 %v98, %v950
    %v952 = vpop.f32.mrf.mxu0
    %v953 = vpop.f32.mrf.mxu0
    %v954 = vadd.f32 %v99, %v953
    %v955 = vpop.f32.mrf.mxu0
    %956 = vmatprep.mubr.bf16.mxu0 0
    %957 = vmatmul.mubr.bf16.gmra.mxu0 %v891
    %v958 = vpop.f32.mrf.mxu0
    %v959 = vadd.f32 %v100, %v958
    %v960 = vpop.f32.mrf.mxu0
    %v961 = vpop.f32.mrf.mxu0
    %v962 = vadd.f32 %v101, %v961
    %v963 = vpop.f32.mrf.mxu0
    %964 = vmatprep.mubr.bf16.mxu0 0
    %965 = vmatmul.mubr.bf16.gmra.mxu0 %v894
    %v966 = vpop.f32.mrf.mxu0
    %v967 = vadd.f32 %v102, %v966
    %v968 = vpop.f32.mrf.mxu0
    %v969 = vpop.f32.mrf.mxu0
    %v970 = vadd.f32 %v103, %v969
    %v971 = vpop.f32.mrf.mxu0
    %972 = vdwg.mxu0
    %v973 = vsel %vm594, %v943, -inf
    %974 = vmax.xlane.f32.xlu0 %v973
    %v975 = vpop.xlane.xlu0 %974
    %v976 = vsel %vm594, %v946, -inf
    %977 = vmax.xlane.f32.xlu0 %v976
    %v978 = vpop.xlane.xlu0 %977
    %v979 = vsel %vm594, %v951, -inf
    %980 = vmax.xlane.f32.xlu0 %v979
    %v981 = vpop.xlane.xlu0 %980
    %v982 = vsel %vm594, %v954, -inf
    %983 = vmax.xlane.f32.xlu0 %v982
    %v984 = vpop.xlane.xlu0 %983
    %v985 = vsel %vm594, %v959, -inf
    %986 = vmax.xlane.f32.xlu0 %v985
    %v987 = vpop.xlane.xlu0 %986
    %v988 = vsel %vm594, %v962, -inf
    %989 = vmax.xlane.f32.xlu0 %v988
    %v990 = vpop.xlane.xlu0 %989
    %v991 = vsel %vm594, %v967, -inf
    %992 = vmax.xlane.f32.xlu0 %v991
    %v993 = vpop.xlane.xlu0 %992
    %v994 = vsel %vm594, %v970, -inf
    %995 = vmax.xlane.f32.xlu0 %v994
    %v996 = vpop.xlane.xlu0 %995
    %v997 = vsub.f32 %v943, %v975
    %v998 = vsub.f32 %v946, %v978
    %v999 = vsub.f32 %v951, %v981
    %v1000 = vsub.f32 %v954, %v984
    %v1001 = vsub.f32 %v959, %v987
    %v1002 = vsub.f32 %v962, %v990
    %v1003 = vsub.f32 %v967, %v993
    %v1004 = vsub.f32 %v970, %v996
    %v1005 = vmul.f32 %v997, 1.442695
    %v1006 = vpow.pop %v1005
    %v1007 = vmul.f32 %v998, 1.442695
    %v1008 = vpow.pop %v1007
    %v1009 = vmul.f32 %v999, 1.442695
    %v1010 = vpow.pop %v1009
    %v1011 = vmul.f32 %v1000, 1.442695
    %v1012 = vpow.pop %v1011
    %v1013 = vmul.f32 %v1001, 1.442695
    %v1014 = vpow.pop %v1013
    %v1015 = vmul.f32 %v1002, 1.442695
    %v1016 = vpow.pop %v1015
    %v1017 = vmul.f32 %v1003, 1.442695
    %v1018 = vpow.pop %v1017
    %v1019 = vmul.f32 %v1004, 1.442695
    %v1020 = vpow.pop %v1019
    %v1021 = vsel %vm594, %v1006, 0.0
    %1022 = vadd.xlane.f32.xlu0 %v1021
    %v1023 = vpop.xlane.xlu0 %1022
    %v1024 = vsel %vm594, %v1008, 0.0
    %1025 = vadd.xlane.f32.xlu0 %v1024
    %v1026 = vpop.xlane.xlu0 %1025
    %v1027 = vsel %vm594, %v1010, 0.0
    %1028 = vadd.xlane.f32.xlu0 %v1027
    %v1029 = vpop.xlane.xlu0 %1028
    %v1030 = vsel %vm594, %v1012, 0.0
    %1031 = vadd.xlane.f32.xlu0 %v1030
    %v1032 = vpop.xlane.xlu0 %1031
    %v1033 = vsel %vm594, %v1014, 0.0
    %1034 = vadd.xlane.f32.xlu0 %v1033
    %v1035 = vpop.xlane.xlu0 %1034
    %v1036 = vsel %vm594, %v1016, 0.0
    %1037 = vadd.xlane.f32.xlu0 %v1036
    %v1038 = vpop.xlane.xlu0 %1037
    %v1039 = vsel %vm594, %v1018, 0.0
    %1040 = vadd.xlane.f32.xlu0 %v1039
    %v1041 = vpop.xlane.xlu0 %1040
    %v1042 = vsel %vm594, %v1020, 0.0
    %1043 = vadd.xlane.f32.xlu0 %v1042
    %v1044 = vpop.xlane.xlu0 %1043
    %v1045 = vrcp.pop %v1023
    %v1046 = vrcp.pop %v1026
    %v1047 = vrcp.pop %v1029
    %v1048 = vrcp.pop %v1032
    %v1049 = vrcp.pop %v1035
    %v1050 = vrcp.pop %v1038
    %v1051 = vrcp.pop %v1041
    %v1052 = vrcp.pop %v1044
    %v1053 = vmul.f32 %v1006, %v1045
    %v1054 = vmul.f32 %v1008, %v1046
    %v1055 = vmul.f32 %v1010, %v1047
    %v1056 = vmul.f32 %v1012, %v1048
    %v1057 = vmul.f32 %v1014, %v1049
    %v1058 = vmul.f32 %v1016, %v1050
    %v1059 = vmul.f32 %v1018, %v1051
    %v1060 = vmul.f32 %v1020, %v1052
    %v1061 = vpack.c.bf16 %v1054, %v1053
    %v1062 = vpack.c.bf16 %v1056, %v1055
    %v1063 = vpack.c.bf16 %v1058, %v1057
    %v1064 = vpack.c.bf16 %v1060, %v1059
    %1069 = vrot.lane.b32.xlu0 %v496, 64
    %v1070 = vpop.permute.xlu0 %1069
    %1071 = vrot.lane.b32.xlu0 %v498, 64
    %v1072 = vpop.permute.xlu0 %1071
    %1073 = vrot.lane.b32.xlu0 %v500, 64
    %v1074 = vpop.permute.xlu0 %1073
    %1075 = vrot.lane.b32.xlu0 %v502, 64
    %v1076 = vpop.permute.xlu0 %1075
    %v1082 = vsel %vm594, %v1061, 0
    %v1085 = vsel %vm594, %v1062, 0
    %v1088 = vsel %vm594, %v1063, 0
    %v1091 = vsel %vm594, %v1064, 0
    %1093 = vmatprep.subr.bf16.mxu0 0
    %1094 = vmatpush1.bf16.msra.mxu0 0
    %1095 = vmatprep.subr.bf16.mxu0 0
    %1096 = vmatpush1.bf16.msra.mxu0 0
    %1097 = vmatprep.subr.bf16.mxu0 0
    %1098 = vmatpush1.bf16.msra.mxu0 0
    %1099 = vmatprep.subr.bf16.mxu0 0
    %1100 = vmatpush1.bf16.msra.mxu0 0
    %1101 = vmatprep.subr.bf16.mxu0 0
    %1102 = vmatpush1.bf16.msra.mxu0 %v1076
    %1103 = vmatprep.subr.bf16.mxu0 0
    %1104 = vmatpush1.bf16.msra.mxu0 %v1074
    %1105 = vmatprep.subr.bf16.mxu0 0
    %1106 = vmatpush1.bf16.msra.mxu0 %v1072
    %1107 = vmatprep.subr.bf16.mxu0 0
    %1108 = vmatpush1.bf16.msra.mxu0 %v1070
    %1109 = vmatprep.subr.bf16.mxu0 0
    %1110 = vmatpush2.bf16.msra.mxu0 0
    %1111 = vmatprep.subr.bf16.mxu0 0
    %1112 = vmatpush2.bf16.msra.mxu0 0
    %1113 = vmatprep.subr.bf16.mxu0 0
    %1114 = vmatpush2.bf16.msra.mxu0 0
    %1115 = vmatprep.subr.bf16.mxu0 0
    %1116 = vmatpush2.bf16.msra.mxu0 0
    %1117 = vmatprep.subr.bf16.mxu0 0
    %1118 = vmatpush2.bf16.msra.mxu0 0
    %1119 = vmatprep.subr.bf16.mxu0 0
    %1120 = vmatpush2.bf16.msra.mxu0 0
    %1121 = vmatprep.subr.bf16.mxu0 0
    %1122 = vmatpush2.bf16.msra.mxu0 0
    %1123 = vmatprep.subr.bf16.mxu0 0
    %1124 = vmatpush2.bf16.msra.mxu0 0
    %1125 = vmatprep.mubr.bf16.mxu0 0
    %1126 = vmatmul.mubr.bf16.gmra.mxu0 %v1082
    %v1127 = vpop.f32.mrf.mxu0
    %v1128 = vadd.f32 0.0, %v1127
    %v1129 = vpop.f32.mrf.mxu0
    %v1130 = vpop.f32.mrf.mxu0
    %v1131 = vadd.f32 0.0, %v1130
    %v1132 = vpop.f32.mrf.mxu0
    %1133 = vmatprep.mubr.bf16.mxu0 0
    %1134 = vmatmul.mubr.bf16.gmra.mxu0 %v1085
    %v1135 = vpop.f32.mrf.mxu0
    %v1136 = vadd.f32 0.0, %v1135
    %v1137 = vpop.f32.mrf.mxu0
    %v1138 = vpop.f32.mrf.mxu0
    %v1139 = vadd.f32 0.0, %v1138
    %v1140 = vpop.f32.mrf.mxu0
    %1141 = vmatprep.mubr.bf16.mxu0 0
    %1142 = vmatmul.mubr.bf16.gmra.mxu0 %v1088
    %v1143 = vpop.f32.mrf.mxu0
    %v1144 = vadd.f32 0.0, %v1143
    %v1145 = vpop.f32.mrf.mxu0
    %v1146 = vpop.f32.mrf.mxu0
    %v1147 = vadd.f32 0.0, %v1146
    %v1148 = vpop.f32.mrf.mxu0
    %1149 = vmatprep.mubr.bf16.mxu0 0
    %1150 = vmatmul.mubr.bf16.gmra.mxu0 %v1091
    %v1151 = vpop.f32.mrf.mxu0
    %v1152 = vadd.f32 0.0, %v1151
    %v1153 = vpop.f32.mrf.mxu0
    %v1154 = vpop.f32.mrf.mxu0
    %v1155 = vadd.f32 0.0, %v1154
    %v1156 = vpop.f32.mrf.mxu0
    %1157 = vdwg.mxu0
    %v1158 = vxor.u32 %v1128, 2147483648
    %v1159 = vxor.u32 %v1131, 2147483648
    %v1160 = vxor.u32 %v1136, 2147483648
    %v1161 = vxor.u32 %v1139, 2147483648
    %v1162 = vxor.u32 %v1144, 2147483648
    %v1163 = vxor.u32 %v1147, 2147483648
    %v1164 = vxor.u32 %v1152, 2147483648
    %v1165 = vxor.u32 %v1155, 2147483648
    %v1166 = vmul.f32 %v1158, 1.442695
    %v1167 = vpow.pop %v1166
    %v1168 = vmul.f32 %v1159, 1.442695
    %v1169 = vpow.pop %v1168
    %v1170 = vmul.f32 %v1160, 1.442695
    %v1171 = vpow.pop %v1170
    %v1172 = vmul.f32 %v1161, 1.442695
    %v1173 = vpow.pop %v1172
    %v1174 = vmul.f32 %v1162, 1.442695
    %v1175 = vpow.pop %v1174
    %v1176 = vmul.f32 %v1163, 1.442695
    %v1177 = vpow.pop %v1176
    %v1178 = vmul.f32 %v1164, 1.442695
    %v1179 = vpow.pop %v1178
    %v1180 = vmul.f32 %v1165, 1.442695
    %v1181 = vpow.pop %v1180
    %v1182 = vadd.f32 %v1167, 1.0
    %v1183 = vadd.f32 %v1169, 1.0
    %v1184 = vadd.f32 %v1171, 1.0
    %v1185 = vadd.f32 %v1173, 1.0
    %v1186 = vadd.f32 %v1175, 1.0
    %v1187 = vadd.f32 %v1177, 1.0
    %v1188 = vadd.f32 %v1179, 1.0
    %v1189 = vadd.f32 %v1181, 1.0
    %v1190 = vrcp.pop %v1182
    %v1191 = vmul.f32 1.0, %v1190
    %v1192 = vrcp.pop %v1183
    %v1193 = vmul.f32 1.0, %v1192
    %v1194 = vrcp.pop %v1184
    %v1195 = vmul.f32 1.0, %v1194
    %v1196 = vrcp.pop %v1185
    %v1197 = vmul.f32 1.0, %v1196
    %v1198 = vrcp.pop %v1186
    %v1199 = vmul.f32 1.0, %v1198
    %v1200 = vrcp.pop %v1187
    %v1201 = vmul.f32 1.0, %v1200
    %v1202 = vrcp.pop %v1188
    %v1203 = vmul.f32 1.0, %v1202
    %v1204 = vrcp.pop %v1189
    %v1205 = vmul.f32 1.0, %v1204
    %v1206 = vmul.f32 %v1128, %v1191
    %v1207 = vmul.f32 %v1131, %v1193
    %v1208 = vmul.f32 %v1136, %v1195
    %v1209 = vmul.f32 %v1139, %v1197
    %v1210 = vmul.f32 %v1144, %v1199
    %v1211 = vmul.f32 %v1147, %v1201
    %v1212 = vmul.f32 %v1152, %v1203
    %v1213 = vmul.f32 %v1155, %v1205
    %1222 = vrot.lane.b32.xlu0 %v1128, 32
    %v1223 = vpop.permute.xlu0 %1222
    %1224 = vrot.lane.b32.xlu0 %v1131, 32
    %v1225 = vpop.permute.xlu0 %1224
    %1226 = vrot.lane.b32.xlu0 %v1136, 32
    %v1227 = vpop.permute.xlu0 %1226
    %1228 = vrot.lane.b32.xlu0 %v1139, 32
    %v1229 = vpop.permute.xlu0 %1228
    %1230 = vrot.lane.b32.xlu0 %v1144, 32
    %v1231 = vpop.permute.xlu0 %1230
    %1232 = vrot.lane.b32.xlu0 %v1147, 32
    %v1233 = vpop.permute.xlu0 %1232
    %1234 = vrot.lane.b32.xlu0 %v1152, 32
    %v1235 = vpop.permute.xlu0 %1234
    %1236 = vrot.lane.b32.xlu0 %v1155, 32
    %v1237 = vpop.permute.xlu0 %1236
    %v1246 = vmul.f32 %v1206, %v1223
    %v1247 = vmul.f32 %v1207, %v1225
    %v1248 = vmul.f32 %v1208, %v1227
    %v1249 = vmul.f32 %v1209, %v1229
    %v1250 = vmul.f32 %v1210, %v1231
    %v1251 = vmul.f32 %v1211, %v1233
    %v1252 = vmul.f32 %v1212, %v1235
    %v1253 = vmul.f32 %v1213, %v1237
    %1254 = vrot.lane.b32.xlu0 %v488, 64
    %v1255 = vpop.permute.xlu0 %1254
    %1256 = vrot.lane.b32.xlu0 %v489, 64
    %v1257 = vpop.permute.xlu0 %1256
    %1258 = vrot.lane.b32.xlu0 %v490, 64
    %v1259 = vpop.permute.xlu0 %1258
    %1260 = vrot.lane.b32.xlu0 %v491, 64
    %v1261 = vpop.permute.xlu0 %1260
    %1262 = vrot.lane.b32.xlu0 %v492, 64
    %v1263 = vpop.permute.xlu0 %1262
    %1264 = vrot.lane.b32.xlu0 %v493, 64
    %v1265 = vpop.permute.xlu0 %1264
    %1266 = vrot.lane.b32.xlu0 %v494, 64
    %v1267 = vpop.permute.xlu0 %1266
    %1268 = vrot.lane.b32.xlu0 %v495, 64
    %v1269 = vpop.permute.xlu0 %1268
    %v1271 = vsel %vm504, %v1255, 0
    %v1274 = vsel %vm504, %v1257, 0
    %v1277 = vsel %vm504, %v1259, 0
    %v1280 = vsel %vm504, %v1261, 0
    %v1283 = vsel %vm504, %v1263, 0
    %v1286 = vsel %vm504, %v1265, 0
    %v1289 = vsel %vm504, %v1267, 0
    %v1292 = vsel %vm504, %v1269, 0
    %1294 = vmatprep.subr.bf16.mxu0 0
    %1295 = vmatpush1.bf16.xpose.msra.mxu0 0
    %1296 = vmatprep.subr.bf16.mxu0 0
    %1297 = vmatpush1.bf16.xpose.msra.mxu0 0
    %1298 = vmatprep.subr.bf16.mxu0 0
    %1299 = vmatpush1.bf16.xpose.msra.mxu0 0
    %1300 = vmatprep.subr.bf16.mxu0 0
    %1301 = vmatpush1.bf16.xpose.msra.mxu0 0
    %1302 = vmatprep.subr.bf16.mxu0 0
    %1303 = vmatpush1.bf16.xpose.msra.mxu0 %v1292
    %1304 = vmatprep.subr.bf16.mxu0 0
    %1305 = vmatpush1.bf16.xpose.msra.mxu0 %v1289
    %1306 = vmatprep.subr.bf16.mxu0 0
    %1307 = vmatpush1.bf16.xpose.msra.mxu0 %v1286
    %1308 = vmatprep.subr.bf16.mxu0 0
    %1309 = vmatpush1.bf16.xpose.msra.mxu0 %v1283
    %1310 = vmatprep.subr.bf16.mxu0 0
    %1311 = vmatpush2.bf16.xpose.msra.mxu0 0
    %1312 = vmatprep.subr.bf16.mxu0 0
    %1313 = vmatpush2.bf16.xpose.msra.mxu0 0
    %1314 = vmatprep.subr.bf16.mxu0 0
    %1315 = vmatpush2.bf16.xpose.msra.mxu0 0
    %1316 = vmatprep.subr.bf16.mxu0 0
    %1317 = vmatpush2.bf16.xpose.msra.mxu0 0
    %1318 = vmatprep.subr.bf16.mxu0 0
    %1319 = vmatpush2.bf16.xpose.msra.mxu0 0
    %1320 = vmatprep.subr.bf16.mxu0 0
    %1321 = vmatpush2.bf16.xpose.msra.mxu0 0
    %1322 = vmatprep.subr.bf16.mxu0 0
    %1323 = vmatpush2.bf16.xpose.msra.mxu0 0
    %1324 = vmatprep.subr.bf16.mxu0 0
    %1325 = vmatpush2.bf16.xpose.msra.mxu0 0
    %1326 = vmatprep.mubr.bf16.mxu0 0
    %1327 = vmatmul.mubr.bf16.gmra.mxu0 %v1271
    %v1328 = vpop.f32.mrf.mxu0
    %v1329 = vadd.f32 %v96, %v1328
    %v1330 = vpop.f32.mrf.mxu0
    %v1331 = vpop.f32.mrf.mxu0
    %v1332 = vadd.f32 %v97, %v1331
    %v1333 = vpop.f32.mrf.mxu0
    %1334 = vmatprep.mubr.bf16.mxu0 0
    %1335 = vmatmul.mubr.bf16.gmra.mxu0 %v1274
    %v1336 = vpop.f32.mrf.mxu0
    %v1337 = vadd.f32 %v98, %v1336
    %v1338 = vpop.f32.mrf.mxu0
    %v1339 = vpop.f32.mrf.mxu0
    %v1340 = vadd.f32 %v99, %v1339
    %v1341 = vpop.f32.mrf.mxu0
    %1342 = vmatprep.mubr.bf16.mxu0 0
    %1343 = vmatmul.mubr.bf16.gmra.mxu0 %v1277
    %v1344 = vpop.f32.mrf.mxu0
    %v1345 = vadd.f32 %v100, %v1344
    %v1346 = vpop.f32.mrf.mxu0
    %v1347 = vpop.f32.mrf.mxu0
    %v1348 = vadd.f32 %v101, %v1347
    %v1349 = vpop.f32.mrf.mxu0
    %1350 = vmatprep.mubr.bf16.mxu0 0
    %1351 = vmatmul.mubr.bf16.gmra.mxu0 %v1280
    %v1352 = vpop.f32.mrf.mxu0
    %v1353 = vadd.f32 %v102, %v1352
    %v1354 = vpop.f32.mrf.mxu0
    %v1355 = vpop.f32.mrf.mxu0
    %v1356 = vadd.f32 %v103, %v1355
    %v1357 = vpop.f32.mrf.mxu0
    %1358 = vdwg.mxu0
    %v1359 = vsel %vm594, %v1329, -inf
    %1360 = vmax.xlane.f32.xlu0 %v1359
    %v1361 = vpop.xlane.xlu0 %1360
    %v1362 = vsel %vm594, %v1332, -inf
    %1363 = vmax.xlane.f32.xlu0 %v1362
    %v1364 = vpop.xlane.xlu0 %1363
    %v1365 = vsel %vm594, %v1337, -inf
    %1366 = vmax.xlane.f32.xlu0 %v1365
    %v1367 = vpop.xlane.xlu0 %1366
    %v1368 = vsel %vm594, %v1340, -inf
    %1369 = vmax.xlane.f32.xlu0 %v1368
    %v1370 = vpop.xlane.xlu0 %1369
    %v1371 = vsel %vm594, %v1345, -inf
    %1372 = vmax.xlane.f32.xlu0 %v1371
    %v1373 = vpop.xlane.xlu0 %1372
    %v1374 = vsel %vm594, %v1348, -inf
    %1375 = vmax.xlane.f32.xlu0 %v1374
    %v1376 = vpop.xlane.xlu0 %1375
    %v1377 = vsel %vm594, %v1353, -inf
    %1378 = vmax.xlane.f32.xlu0 %v1377
    %v1379 = vpop.xlane.xlu0 %1378
    %v1380 = vsel %vm594, %v1356, -inf
    %1381 = vmax.xlane.f32.xlu0 %v1380
    %v1382 = vpop.xlane.xlu0 %1381
    %v1383 = vsub.f32 %v1329, %v1361
    %v1384 = vsub.f32 %v1332, %v1364
    %v1385 = vsub.f32 %v1337, %v1367
    %v1386 = vsub.f32 %v1340, %v1370
    %v1387 = vsub.f32 %v1345, %v1373
    %v1388 = vsub.f32 %v1348, %v1376
    %v1389 = vsub.f32 %v1353, %v1379
    %v1390 = vsub.f32 %v1356, %v1382
    %v1391 = vmul.f32 %v1383, 1.442695
    %v1392 = vpow.pop %v1391
    %v1393 = vmul.f32 %v1384, 1.442695
    %v1394 = vpow.pop %v1393
    %v1395 = vmul.f32 %v1385, 1.442695
    %v1396 = vpow.pop %v1395
    %v1397 = vmul.f32 %v1386, 1.442695
    %v1398 = vpow.pop %v1397
    %v1399 = vmul.f32 %v1387, 1.442695
    %v1400 = vpow.pop %v1399
    %v1401 = vmul.f32 %v1388, 1.442695
    %v1402 = vpow.pop %v1401
    %v1403 = vmul.f32 %v1389, 1.442695
    %v1404 = vpow.pop %v1403
    %v1405 = vmul.f32 %v1390, 1.442695
    %v1406 = vpow.pop %v1405
    %v1407 = vsel %vm594, %v1392, 0.0
    %1408 = vadd.xlane.f32.xlu0 %v1407
    %v1409 = vpop.xlane.xlu0 %1408
    %v1410 = vsel %vm594, %v1394, 0.0
    %1411 = vadd.xlane.f32.xlu0 %v1410
    %v1412 = vpop.xlane.xlu0 %1411
    %v1413 = vsel %vm594, %v1396, 0.0
    %1414 = vadd.xlane.f32.xlu0 %v1413
    %v1415 = vpop.xlane.xlu0 %1414
    %v1416 = vsel %vm594, %v1398, 0.0
    %1417 = vadd.xlane.f32.xlu0 %v1416
    %v1418 = vpop.xlane.xlu0 %1417
    %v1419 = vsel %vm594, %v1400, 0.0
    %1420 = vadd.xlane.f32.xlu0 %v1419
    %v1421 = vpop.xlane.xlu0 %1420
    %v1422 = vsel %vm594, %v1402, 0.0
    %1423 = vadd.xlane.f32.xlu0 %v1422
    %v1424 = vpop.xlane.xlu0 %1423
    %v1425 = vsel %vm594, %v1404, 0.0
    %1426 = vadd.xlane.f32.xlu0 %v1425
    %v1427 = vpop.xlane.xlu0 %1426
    %v1428 = vsel %vm594, %v1406, 0.0
    %1429 = vadd.xlane.f32.xlu0 %v1428
    %v1430 = vpop.xlane.xlu0 %1429
    %v1431 = vrcp.pop %v1409
    %v1432 = vrcp.pop %v1412
    %v1433 = vrcp.pop %v1415
    %v1434 = vrcp.pop %v1418
    %v1435 = vrcp.pop %v1421
    %v1436 = vrcp.pop %v1424
    %v1437 = vrcp.pop %v1427
    %v1438 = vrcp.pop %v1430
    %v1439 = vmul.f32 %v1392, %v1431
    %v1440 = vmul.f32 %v1394, %v1432
    %v1441 = vmul.f32 %v1396, %v1433
    %v1442 = vmul.f32 %v1398, %v1434
    %v1443 = vmul.f32 %v1400, %v1435
    %v1444 = vmul.f32 %v1402, %v1436
    %v1445 = vmul.f32 %v1404, %v1437
    %v1446 = vmul.f32 %v1406, %v1438
    %v1447 = vpack.c.bf16 %v1440, %v1439
    %v1448 = vpack.c.bf16 %v1442, %v1441
    %v1449 = vpack.c.bf16 %v1444, %v1443
    %v1450 = vpack.c.bf16 %v1446, %v1445
    %v1452 = vsel %vm594, %v1447, 0
    %v1455 = vsel %vm594, %v1448, 0
    %v1458 = vsel %vm594, %v1449, 0
    %v1461 = vsel %vm594, %v1450, 0
    %1463 = vmatprep.subr.bf16.mxu0 0
    %1464 = vmatpush1.bf16.msra.mxu0 0
    %1465 = vmatprep.subr.bf16.mxu0 0
    %1466 = vmatpush1.bf16.msra.mxu0 0
    %1467 = vmatprep.subr.bf16.mxu0 0
    %1468 = vmatpush1.bf16.msra.mxu0 0
    %1469 = vmatprep.subr.bf16.mxu0 0
    %1470 = vmatpush1.bf16.msra.mxu0 0
    %1471 = vmatprep.subr.bf16.mxu0 0
    %1472 = vmatpush1.bf16.msra.mxu0 %v503
    %1473 = vmatprep.subr.bf16.mxu0 0
    %1474 = vmatpush1.bf16.msra.mxu0 %v501
    %1475 = vmatprep.subr.bf16.mxu0 0
    %1476 = vmatpush1.bf16.msra.mxu0 %v499
    %1477 = vmatprep.subr.bf16.mxu0 0
    %1478 = vmatpush1.bf16.msra.mxu0 %v497
    %1479 = vmatprep.subr.bf16.mxu0 0
    %1480 = vmatpush2.bf16.msra.mxu0 0
    %1481 = vmatprep.subr.bf16.mxu0 0
    %1482 = vmatpush2.bf16.msra.mxu0 0
    %1483 = vmatprep.subr.bf16.mxu0 0
    %1484 = vmatpush2.bf16.msra.mxu0 0
    %1485 = vmatprep.subr.bf16.mxu0 0
    %1486 = vmatpush2.bf16.msra.mxu0 0
    %1487 = vmatprep.subr.bf16.mxu0 0
    %1488 = vmatpush2.bf16.msra.mxu0 0
    %1489 = vmatprep.subr.bf16.mxu0 0
    %1490 = vmatpush2.bf16.msra.mxu0 0
    %1491 = vmatprep.subr.bf16.mxu0 0
    %1492 = vmatpush2.bf16.msra.mxu0 0
    %1493 = vmatprep.subr.bf16.mxu0 0
    %1494 = vmatpush2.bf16.msra.mxu0 0
    %1495 = vmatprep.mubr.bf16.mxu0 0
    %1496 = vmatmul.mubr.bf16.gmra.mxu0 %v1452
    %v1497 = vpop.f32.mrf.mxu0
    %v1498 = vadd.f32 0.0, %v1497
    %v1499 = vpop.f32.mrf.mxu0
    %v1500 = vpop.f32.mrf.mxu0
    %v1501 = vadd.f32 0.0, %v1500
    %v1502 = vpop.f32.mrf.mxu0
    %1503 = vmatprep.mubr.bf16.mxu0 0
    %1504 = vmatmul.mubr.bf16.gmra.mxu0 %v1455
    %v1505 = vpop.f32.mrf.mxu0
    %v1506 = vadd.f32 0.0, %v1505
    %v1507 = vpop.f32.mrf.mxu0
    %v1508 = vpop.f32.mrf.mxu0
    %v1509 = vadd.f32 0.0, %v1508
    %v1510 = vpop.f32.mrf.mxu0
    %1511 = vmatprep.mubr.bf16.mxu0 0
    %1512 = vmatmul.mubr.bf16.gmra.mxu0 %v1458
    %v1513 = vpop.f32.mrf.mxu0
    %v1514 = vadd.f32 0.0, %v1513
    %v1515 = vpop.f32.mrf.mxu0
    %v1516 = vpop.f32.mrf.mxu0
    %v1517 = vadd.f32 0.0, %v1516
    %v1518 = vpop.f32.mrf.mxu0
    %1519 = vmatprep.mubr.bf16.mxu0 0
    %1520 = vmatmul.mubr.bf16.gmra.mxu0 %v1461
    %v1521 = vpop.f32.mrf.mxu0
    %v1522 = vadd.f32 0.0, %v1521
    %v1523 = vpop.f32.mrf.mxu0
    %v1524 = vpop.f32.mrf.mxu0
    %v1525 = vadd.f32 0.0, %v1524
    %v1526 = vpop.f32.mrf.mxu0
    %1527 = vdwg.mxu0
    %v1528 = vxor.u32 %v1498, 2147483648
    %v1529 = vxor.u32 %v1501, 2147483648
    %v1530 = vxor.u32 %v1506, 2147483648
    %v1531 = vxor.u32 %v1509, 2147483648
    %v1532 = vxor.u32 %v1514, 2147483648
    %v1533 = vxor.u32 %v1517, 2147483648
    %v1534 = vxor.u32 %v1522, 2147483648
    %v1535 = vxor.u32 %v1525, 2147483648
    %v1536 = vmul.f32 %v1528, 1.442695
    %v1537 = vpow.pop %v1536
    %v1538 = vmul.f32 %v1529, 1.442695
    %v1539 = vpow.pop %v1538
    %v1540 = vmul.f32 %v1530, 1.442695
    %v1541 = vpow.pop %v1540
    %v1542 = vmul.f32 %v1531, 1.442695
    %v1543 = vpow.pop %v1542
    %v1544 = vmul.f32 %v1532, 1.442695
    %v1545 = vpow.pop %v1544
    %v1546 = vmul.f32 %v1533, 1.442695
    %v1547 = vpow.pop %v1546
    %v1548 = vmul.f32 %v1534, 1.442695
    %v1549 = vpow.pop %v1548
    %v1550 = vmul.f32 %v1535, 1.442695
    %v1551 = vpow.pop %v1550
    %v1552 = vadd.f32 %v1537, 1.0
    %v1553 = vadd.f32 %v1539, 1.0
    %v1554 = vadd.f32 %v1541, 1.0
    %v1555 = vadd.f32 %v1543, 1.0
    %v1556 = vadd.f32 %v1545, 1.0
    %v1557 = vadd.f32 %v1547, 1.0
    %v1558 = vadd.f32 %v1549, 1.0
    %v1559 = vadd.f32 %v1551, 1.0
    %v1560 = vrcp.pop %v1552
    %v1561 = vmul.f32 1.0, %v1560
    %v1562 = vrcp.pop %v1553
    %v1563 = vmul.f32 1.0, %v1562
    %v1564 = vrcp.pop %v1554
    %v1565 = vmul.f32 1.0, %v1564
    %v1566 = vrcp.pop %v1555
    %v1567 = vmul.f32 1.0, %v1566
    %v1568 = vrcp.pop %v1556
    %v1569 = vmul.f32 1.0, %v1568
    %v1570 = vrcp.pop %v1557
    %v1571 = vmul.f32 1.0, %v1570
    %v1572 = vrcp.pop %v1558
    %v1573 = vmul.f32 1.0, %v1572
    %v1574 = vrcp.pop %v1559
    %v1575 = vmul.f32 1.0, %v1574
    %v1576 = vmul.f32 %v1498, %v1561
    %v1577 = vmul.f32 %v1501, %v1563
    %v1578 = vmul.f32 %v1506, %v1565
    %v1579 = vmul.f32 %v1509, %v1567
    %v1580 = vmul.f32 %v1514, %v1569
    %v1581 = vmul.f32 %v1517, %v1571
    %v1582 = vmul.f32 %v1522, %v1573
    %v1583 = vmul.f32 %v1525, %v1575
    %1592 = vrot.lane.b32.xlu0 %v1498, 32
    %v1593 = vpop.permute.xlu0 %1592
    %1594 = vrot.lane.b32.xlu0 %v1501, 32
    %v1595 = vpop.permute.xlu0 %1594
    %1596 = vrot.lane.b32.xlu0 %v1506, 32
    %v1597 = vpop.permute.xlu0 %1596
    %1598 = vrot.lane.b32.xlu0 %v1509, 32
    %v1599 = vpop.permute.xlu0 %1598
    %1600 = vrot.lane.b32.xlu0 %v1514, 32
    %v1601 = vpop.permute.xlu0 %1600
    %1602 = vrot.lane.b32.xlu0 %v1517, 32
    %v1603 = vpop.permute.xlu0 %1602
    %1604 = vrot.lane.b32.xlu0 %v1522, 32
    %v1605 = vpop.permute.xlu0 %1604
    %1606 = vrot.lane.b32.xlu0 %v1525, 32
    %v1607 = vpop.permute.xlu0 %1606
    %v1616 = vmul.f32 %v1576, %v1593
    %v1617 = vmul.f32 %v1577, %v1595
    %v1618 = vmul.f32 %v1578, %v1597
    %v1619 = vmul.f32 %v1579, %v1599
    %v1620 = vmul.f32 %v1580, %v1601
    %v1621 = vmul.f32 %v1581, %v1603
    %v1622 = vmul.f32 %v1582, %v1605
    %v1623 = vmul.f32 %v1583, %v1607
    %1624 = vrot.lane.b32.xlu0 %v488, 32
    %v1625 = vpop.permute.xlu0 %1624
    %1626 = vrot.lane.b32.xlu0 %v489, 32
    %v1627 = vpop.permute.xlu0 %1626
    %1628 = vrot.lane.b32.xlu0 %v490, 32
    %v1629 = vpop.permute.xlu0 %1628
    %1630 = vrot.lane.b32.xlu0 %v491, 32
    %v1631 = vpop.permute.xlu0 %1630
    %1632 = vrot.lane.b32.xlu0 %v492, 32
    %v1633 = vpop.permute.xlu0 %1632
    %1634 = vrot.lane.b32.xlu0 %v493, 32
    %v1635 = vpop.permute.xlu0 %1634
    %1636 = vrot.lane.b32.xlu0 %v494, 32
    %v1637 = vpop.permute.xlu0 %1636
    %1638 = vrot.lane.b32.xlu0 %v495, 32
    %v1639 = vpop.permute.xlu0 %1638
    %v1641 = vsel %vm504, %v1625, 0
    %v1644 = vsel %vm504, %v1627, 0
    %v1647 = vsel %vm504, %v1629, 0
    %v1650 = vsel %vm504, %v1631, 0
    %v1653 = vsel %vm504, %v1633, 0
    %v1656 = vsel %vm504, %v1635, 0
    %v1659 = vsel %vm504, %v1637, 0
    %v1662 = vsel %vm504, %v1639, 0
    %1664 = vmatprep.subr.bf16.mxu0 0
    %1665 = vmatpush1.bf16.xpose.msra.mxu0 0
    %1666 = vmatprep.subr.bf16.mxu0 0
    %1667 = vmatpush1.bf16.xpose.msra.mxu0 0
    %1668 = vmatprep.subr.bf16.mxu0 0
    %1669 = vmatpush1.bf16.xpose.msra.mxu0 0
    %1670 = vmatprep.subr.bf16.mxu0 0
    %1671 = vmatpush1.bf16.xpose.msra.mxu0 0
    %1672 = vmatprep.subr.bf16.mxu0 0
    %1673 = vmatpush1.bf16.xpose.msra.mxu0 %v1662
    %1674 = vmatprep.subr.bf16.mxu0 0
    %1675 = vmatpush1.bf16.xpose.msra.mxu0 %v1659
    %1676 = vmatprep.subr.bf16.mxu0 0
    %1677 = vmatpush1.bf16.xpose.msra.mxu0 %v1656
    %1678 = vmatprep.subr.bf16.mxu0 0
    %1679 = vmatpush1.bf16.xpose.msra.mxu0 %v1653
    %1680 = vmatprep.subr.bf16.mxu0 0
    %1681 = vmatpush2.bf16.xpose.msra.mxu0 0
    %1682 = vmatprep.subr.bf16.mxu0 0
    %1683 = vmatpush2.bf16.xpose.msra.mxu0 0
    %1684 = vmatprep.subr.bf16.mxu0 0
    %1685 = vmatpush2.bf16.xpose.msra.mxu0 0
    %1686 = vmatprep.subr.bf16.mxu0 0
    %1687 = vmatpush2.bf16.xpose.msra.mxu0 0
    %1688 = vmatprep.subr.bf16.mxu0 0
    %1689 = vmatpush2.bf16.xpose.msra.mxu0 0
    %1690 = vmatprep.subr.bf16.mxu0 0
    %1691 = vmatpush2.bf16.xpose.msra.mxu0 0
    %1692 = vmatprep.subr.bf16.mxu0 0
    %1693 = vmatpush2.bf16.xpose.msra.mxu0 0
    %1694 = vmatprep.subr.bf16.mxu0 0
    %1695 = vmatpush2.bf16.xpose.msra.mxu0 0
    %1696 = vmatprep.mubr.bf16.mxu0 0
    %1697 = vmatmul.mubr.bf16.gmra.mxu0 %v1641
    %v1698 = vpop.f32.mrf.mxu0
    %v1699 = vadd.f32 %v96, %v1698
    %v1700 = vpop.f32.mrf.mxu0
    %v1701 = vpop.f32.mrf.mxu0
    %v1702 = vadd.f32 %v97, %v1701
    %v1703 = vpop.f32.mrf.mxu0
    %1704 = vmatprep.mubr.bf16.mxu0 0
    %1705 = vmatmul.mubr.bf16.gmra.mxu0 %v1644
    %v1706 = vpop.f32.mrf.mxu0
    %v1707 = vadd.f32 %v98, %v1706
    %v1708 = vpop.f32.mrf.mxu0
    %v1709 = vpop.f32.mrf.mxu0
    %v1710 = vadd.f32 %v99, %v1709
    %v1711 = vpop.f32.mrf.mxu0
    %1712 = vmatprep.mubr.bf16.mxu0 0
    %1713 = vmatmul.mubr.bf16.gmra.mxu0 %v1647
    %v1714 = vpop.f32.mrf.mxu0
    %v1715 = vadd.f32 %v100, %v1714
    %v1716 = vpop.f32.mrf.mxu0
    %v1717 = vpop.f32.mrf.mxu0
    %v1718 = vadd.f32 %v101, %v1717
    %v1719 = vpop.f32.mrf.mxu0
    %1720 = vmatprep.mubr.bf16.mxu0 0
    %1721 = vmatmul.mubr.bf16.gmra.mxu0 %v1650
    %v1722 = vpop.f32.mrf.mxu0
    %v1723 = vadd.f32 %v102, %v1722
    %v1724 = vpop.f32.mrf.mxu0
    %v1725 = vpop.f32.mrf.mxu0
    %v1726 = vadd.f32 %v103, %v1725
    %v1727 = vpop.f32.mrf.mxu0
    %1728 = vdwg.mxu0
    %v1729 = vsel %vm594, %v1699, -inf
    %1730 = vmax.xlane.f32.xlu0 %v1729
    %v1731 = vpop.xlane.xlu0 %1730
    %v1732 = vsel %vm594, %v1702, -inf
    %1733 = vmax.xlane.f32.xlu0 %v1732
    %v1734 = vpop.xlane.xlu0 %1733
    %v1735 = vsel %vm594, %v1707, -inf
    %1736 = vmax.xlane.f32.xlu0 %v1735
    %v1737 = vpop.xlane.xlu0 %1736
    %v1738 = vsel %vm594, %v1710, -inf
    %1739 = vmax.xlane.f32.xlu0 %v1738
    %v1740 = vpop.xlane.xlu0 %1739
    %v1741 = vsel %vm594, %v1715, -inf
    %1742 = vmax.xlane.f32.xlu0 %v1741
    %v1743 = vpop.xlane.xlu0 %1742
    %v1744 = vsel %vm594, %v1718, -inf
    %1745 = vmax.xlane.f32.xlu0 %v1744
    %v1746 = vpop.xlane.xlu0 %1745
    %v1747 = vsel %vm594, %v1723, -inf
    %1748 = vmax.xlane.f32.xlu0 %v1747
    %v1749 = vpop.xlane.xlu0 %1748
    %v1750 = vsel %vm594, %v1726, -inf
    %1751 = vmax.xlane.f32.xlu0 %v1750
    %v1752 = vpop.xlane.xlu0 %1751
    %v1753 = vsub.f32 %v1699, %v1731
    %v1754 = vsub.f32 %v1702, %v1734
    %v1755 = vsub.f32 %v1707, %v1737
    %v1756 = vsub.f32 %v1710, %v1740
    %v1757 = vsub.f32 %v1715, %v1743
    %v1758 = vsub.f32 %v1718, %v1746
    %v1759 = vsub.f32 %v1723, %v1749
    %v1760 = vsub.f32 %v1726, %v1752
    %v1761 = vmul.f32 %v1753, 1.442695
    %v1762 = vpow.pop %v1761
    %v1763 = vmul.f32 %v1754, 1.442695
    %v1764 = vpow.pop %v1763
    %v1765 = vmul.f32 %v1755, 1.442695
    %v1766 = vpow.pop %v1765
    %v1767 = vmul.f32 %v1756, 1.442695
    %v1768 = vpow.pop %v1767
    %v1769 = vmul.f32 %v1757, 1.442695
    %v1770 = vpow.pop %v1769
    %v1771 = vmul.f32 %v1758, 1.442695
    %v1772 = vpow.pop %v1771
    %v1773 = vmul.f32 %v1759, 1.442695
    %v1774 = vpow.pop %v1773
    %v1775 = vmul.f32 %v1760, 1.442695
    %v1776 = vpow.pop %v1775
    %v1777 = vsel %vm594, %v1762, 0.0
    %1778 = vadd.xlane.f32.xlu0 %v1777
    %v1779 = vpop.xlane.xlu0 %1778
    %v1780 = vsel %vm594, %v1764, 0.0
    %1781 = vadd.xlane.f32.xlu0 %v1780
    %v1782 = vpop.xlane.xlu0 %1781
    %v1783 = vsel %vm594, %v1766, 0.0
    %1784 = vadd.xlane.f32.xlu0 %v1783
    %v1785 = vpop.xlane.xlu0 %1784
    %v1786 = vsel %vm594, %v1768, 0.0
    %1787 = vadd.xlane.f32.xlu0 %v1786
    %v1788 = vpop.xlane.xlu0 %1787
    %v1789 = vsel %vm594, %v1770, 0.0
    %1790 = vadd.xlane.f32.xlu0 %v1789
    %v1791 = vpop.xlane.xlu0 %1790
    %v1792 = vsel %vm594, %v1772, 0.0
    %1793 = vadd.xlane.f32.xlu0 %v1792
    %v1794 = vpop.xlane.xlu0 %1793
    %v1795 = vsel %vm594, %v1774, 0.0
    %1796 = vadd.xlane.f32.xlu0 %v1795
    %v1797 = vpop.xlane.xlu0 %1796
    %v1798 = vsel %vm594, %v1776, 0.0
    %1799 = vadd.xlane.f32.xlu0 %v1798
    %v1800 = vpop.xlane.xlu0 %1799
    %v1801 = vrcp.pop %v1779
    %v1802 = vrcp.pop %v1782
    %v1803 = vrcp.pop %v1785
    %v1804 = vrcp.pop %v1788
    %v1805 = vrcp.pop %v1791
    %v1806 = vrcp.pop %v1794
    %v1807 = vrcp.pop %v1797
    %v1808 = vrcp.pop %v1800
    %v1809 = vmul.f32 %v1762, %v1801
    %v1810 = vmul.f32 %v1764, %v1802
    %v1811 = vmul.f32 %v1766, %v1803
    %v1812 = vmul.f32 %v1768, %v1804
    %v1813 = vmul.f32 %v1770, %v1805
    %v1814 = vmul.f32 %v1772, %v1806
    %v1815 = vmul.f32 %v1774, %v1807
    %v1816 = vmul.f32 %v1776, %v1808
    %v1817 = vpack.c.bf16 %v1810, %v1809
    %v1818 = vpack.c.bf16 %v1812, %v1811
    %v1819 = vpack.c.bf16 %v1814, %v1813
    %v1820 = vpack.c.bf16 %v1816, %v1815
    %1825 = vrot.lane.b32.xlu0 %v497, 64
    %v1826 = vpop.permute.xlu0 %1825
    %1827 = vrot.lane.b32.xlu0 %v499, 64
    %v1828 = vpop.permute.xlu0 %1827
    %1829 = vrot.lane.b32.xlu0 %v501, 64
    %v1830 = vpop.permute.xlu0 %1829
    %1831 = vrot.lane.b32.xlu0 %v503, 64
    %v1832 = vpop.permute.xlu0 %1831
    %v1838 = vsel %vm594, %v1817, 0
    %v1841 = vsel %vm594, %v1818, 0
    %v1844 = vsel %vm594, %v1819, 0
    %v1847 = vsel %vm594, %v1820, 0
    %1849 = vmatprep.subr.bf16.mxu0 0
    %1850 = vmatpush1.bf16.msra.mxu0 0
    %1851 = vmatprep.subr.bf16.mxu0 0
    %1852 = vmatpush1.bf16.msra.mxu0 0
    %1853 = vmatprep.subr.bf16.mxu0 0
    %1854 = vmatpush1.bf16.msra.mxu0 0
    %1855 = vmatprep.subr.bf16.mxu0 0
    %1856 = vmatpush1.bf16.msra.mxu0 0
    %1857 = vmatprep.subr.bf16.mxu0 0
    %1858 = vmatpush1.bf16.msra.mxu0 %v1832
    %1859 = vmatprep.subr.bf16.mxu0 0
    %1860 = vmatpush1.bf16.msra.mxu0 %v1830
    %1861 = vmatprep.subr.bf16.mxu0 0
    %1862 = vmatpush1.bf16.msra.mxu0 %v1828
    %1863 = vmatprep.subr.bf16.mxu0 0
    %1864 = vmatpush1.bf16.msra.mxu0 %v1826
    %1865 = vmatprep.subr.bf16.mxu0 0
    %1866 = vmatpush2.bf16.msra.mxu0 0
    %1867 = vmatprep.subr.bf16.mxu0 0
    %1868 = vmatpush2.bf16.msra.mxu0 0
    %1869 = vmatprep.subr.bf16.mxu0 0
    %1870 = vmatpush2.bf16.msra.mxu0 0
    %1871 = vmatprep.subr.bf16.mxu0 0
    %1872 = vmatpush2.bf16.msra.mxu0 0
    %1873 = vmatprep.subr.bf16.mxu0 0
    %1874 = vmatpush2.bf16.msra.mxu0 0
    %1875 = vmatprep.subr.bf16.mxu0 0
    %1876 = vmatpush2.bf16.msra.mxu0 0
    %1877 = vmatprep.subr.bf16.mxu0 0
    %1878 = vmatpush2.bf16.msra.mxu0 0
    %1879 = vmatprep.subr.bf16.mxu0 0
    %1880 = vmatpush2.bf16.msra.mxu0 0
    %1881 = vmatprep.mubr.bf16.mxu0 0
    %1882 = vmatmul.mubr.bf16.gmra.mxu0 %v1838
    %v1883 = vpop.f32.mrf.mxu0
    %v1884 = vadd.f32 0.0, %v1883
    %v1885 = vpop.f32.mrf.mxu0
    %v1886 = vpop.f32.mrf.mxu0
    %v1887 = vadd.f32 0.0, %v1886
    %v1888 = vpop.f32.mrf.mxu0
    %1889 = vmatprep.mubr.bf16.mxu0 0
    %1890 = vmatmul.mubr.bf16.gmra.mxu0 %v1841
    %v1891 = vpop.f32.mrf.mxu0
    %v1892 = vadd.f32 0.0, %v1891
    %v1893 = vpop.f32.mrf.mxu0
    %v1894 = vpop.f32.mrf.mxu0
    %v1895 = vadd.f32 0.0, %v1894
    %v1896 = vpop.f32.mrf.mxu0
    %1897 = vmatprep.mubr.bf16.mxu0 0
    %1898 = vmatmul.mubr.bf16.gmra.mxu0 %v1844
    %v1899 = vpop.f32.mrf.mxu0
    %v1900 = vadd.f32 0.0, %v1899
    %v1901 = vpop.f32.mrf.mxu0
    %v1902 = vpop.f32.mrf.mxu0
    %v1903 = vadd.f32 0.0, %v1902
    %v1904 = vpop.f32.mrf.mxu0
    %1905 = vmatprep.mubr.bf16.mxu0 0
    %1906 = vmatmul.mubr.bf16.gmra.mxu0 %v1847
    %v1907 = vpop.f32.mrf.mxu0
    %v1908 = vadd.f32 0.0, %v1907
    %v1909 = vpop.f32.mrf.mxu0
    %v1910 = vpop.f32.mrf.mxu0
    %v1911 = vadd.f32 0.0, %v1910
    %v1912 = vpop.f32.mrf.mxu0
    %1913 = vdwg.mxu0
    %v1914 = vxor.u32 %v1884, 2147483648
    %v1915 = vxor.u32 %v1887, 2147483648
    %v1916 = vxor.u32 %v1892, 2147483648
    %v1917 = vxor.u32 %v1895, 2147483648
    %v1918 = vxor.u32 %v1900, 2147483648
    %v1919 = vxor.u32 %v1903, 2147483648
    %v1920 = vxor.u32 %v1908, 2147483648
    %v1921 = vxor.u32 %v1911, 2147483648
    %v1922 = vmul.f32 %v1914, 1.442695
    %v1923 = vpow.pop %v1922
    %v1924 = vmul.f32 %v1915, 1.442695
    %v1925 = vpow.pop %v1924
    %v1926 = vmul.f32 %v1916, 1.442695
    %v1927 = vpow.pop %v1926
    %v1928 = vmul.f32 %v1917, 1.442695
    %v1929 = vpow.pop %v1928
    %v1930 = vmul.f32 %v1918, 1.442695
    %v1931 = vpow.pop %v1930
    %v1932 = vmul.f32 %v1919, 1.442695
    %v1933 = vpow.pop %v1932
    %v1934 = vmul.f32 %v1920, 1.442695
    %v1935 = vpow.pop %v1934
    %v1936 = vmul.f32 %v1921, 1.442695
    %v1937 = vpow.pop %v1936
    %v1938 = vadd.f32 %v1923, 1.0
    %v1939 = vadd.f32 %v1925, 1.0
    %v1940 = vadd.f32 %v1927, 1.0
    %v1941 = vadd.f32 %v1929, 1.0
    %v1942 = vadd.f32 %v1931, 1.0
    %v1943 = vadd.f32 %v1933, 1.0
    %v1944 = vadd.f32 %v1935, 1.0
    %v1945 = vadd.f32 %v1937, 1.0
    %v1946 = vrcp.pop %v1938
    %v1947 = vmul.f32 1.0, %v1946
    %v1948 = vrcp.pop %v1939
    %v1949 = vmul.f32 1.0, %v1948
    %v1950 = vrcp.pop %v1940
    %v1951 = vmul.f32 1.0, %v1950
    %v1952 = vrcp.pop %v1941
    %v1953 = vmul.f32 1.0, %v1952
    %v1954 = vrcp.pop %v1942
    %v1955 = vmul.f32 1.0, %v1954
    %v1956 = vrcp.pop %v1943
    %v1957 = vmul.f32 1.0, %v1956
    %v1958 = vrcp.pop %v1944
    %v1959 = vmul.f32 1.0, %v1958
    %v1960 = vrcp.pop %v1945
    %v1961 = vmul.f32 1.0, %v1960
    %v1962 = vmul.f32 %v1884, %v1947
    %v1963 = vmul.f32 %v1887, %v1949
    %v1964 = vmul.f32 %v1892, %v1951
    %v1965 = vmul.f32 %v1895, %v1953
    %v1966 = vmul.f32 %v1900, %v1955
    %v1967 = vmul.f32 %v1903, %v1957
    %v1968 = vmul.f32 %v1908, %v1959
    %v1969 = vmul.f32 %v1911, %v1961
    %1978 = vrot.lane.b32.xlu0 %v1884, 32
    %v1979 = vpop.permute.xlu0 %1978
    %1980 = vrot.lane.b32.xlu0 %v1887, 32
    %v1981 = vpop.permute.xlu0 %1980
    %1982 = vrot.lane.b32.xlu0 %v1892, 32
    %v1983 = vpop.permute.xlu0 %1982
    %1984 = vrot.lane.b32.xlu0 %v1895, 32
    %v1985 = vpop.permute.xlu0 %1984
    %1986 = vrot.lane.b32.xlu0 %v1900, 32
    %v1987 = vpop.permute.xlu0 %1986
    %1988 = vrot.lane.b32.xlu0 %v1903, 32
    %v1989 = vpop.permute.xlu0 %1988
    %1990 = vrot.lane.b32.xlu0 %v1908, 32
    %v1991 = vpop.permute.xlu0 %1990
    %1992 = vrot.lane.b32.xlu0 %v1911, 32
    %v1993 = vpop.permute.xlu0 %1992
    %v2002 = vmul.f32 %v1962, %v1979
    %v2003 = vmul.f32 %v1963, %v1981
    %v2004 = vmul.f32 %v1964, %v1983
    %v2005 = vmul.f32 %v1965, %v1985
    %v2006 = vmul.f32 %v1966, %v1987
    %v2007 = vmul.f32 %v1967, %v1989
    %v2008 = vmul.f32 %v1968, %v1991
    %v2009 = vmul.f32 %v1969, %v1993
    %2018 = vrot.lane.b32.xlu0 %v852, 96
    %v2019 = vpop.permute.xlu0 %2018
    %2020 = vrot.lane.b32.xlu0 %v853, 96
    %v2021 = vpop.permute.xlu0 %2020
    %2022 = vrot.lane.b32.xlu0 %v854, 96
    %v2023 = vpop.permute.xlu0 %2022
    %2024 = vrot.lane.b32.xlu0 %v855, 96
    %v2025 = vpop.permute.xlu0 %2024
    %2026 = vrot.lane.b32.xlu0 %v856, 96
    %v2027 = vpop.permute.xlu0 %2026
    %2028 = vrot.lane.b32.xlu0 %v857, 96
    %v2029 = vpop.permute.xlu0 %2028
    %2030 = vrot.lane.b32.xlu0 %v858, 96
    %v2031 = vpop.permute.xlu0 %2030
    %2032 = vrot.lane.b32.xlu0 %v859, 96
    %v2033 = vpop.permute.xlu0 %2032
    %2050 = vrot.lane.b32.xlu0 %v1616, 32
    %v2051 = vpop.permute.xlu0 %2050
    %2052 = vrot.lane.b32.xlu0 %v1617, 32
    %v2053 = vpop.permute.xlu0 %2052
    %2054 = vrot.lane.b32.xlu0 %v1618, 32
    %v2055 = vpop.permute.xlu0 %2054
    %2056 = vrot.lane.b32.xlu0 %v1619, 32
    %v2057 = vpop.permute.xlu0 %2056
    %2058 = vrot.lane.b32.xlu0 %v1620, 32
    %v2059 = vpop.permute.xlu0 %2058
    %2060 = vrot.lane.b32.xlu0 %v1621, 32
    %v2061 = vpop.permute.xlu0 %2060
    %2062 = vrot.lane.b32.xlu0 %v1622, 32
    %v2063 = vpop.permute.xlu0 %2062
    %2064 = vrot.lane.b32.xlu0 %v1623, 32
    %v2065 = vpop.permute.xlu0 %2064
    %2082 = vrot.lane.b32.xlu0 %v2002, 64
    %v2083 = vpop.permute.xlu0 %2082
    %2084 = vrot.lane.b32.xlu0 %v2003, 64
    %v2085 = vpop.permute.xlu0 %2084
    %2086 = vrot.lane.b32.xlu0 %v2004, 64
    %v2087 = vpop.permute.xlu0 %2086
    %2088 = vrot.lane.b32.xlu0 %v2005, 64
    %v2089 = vpop.permute.xlu0 %2088
    %2090 = vrot.lane.b32.xlu0 %v2006, 64
    %v2091 = vpop.permute.xlu0 %2090
    %2092 = vrot.lane.b32.xlu0 %v2007, 64
    %v2093 = vpop.permute.xlu0 %2092
    %2094 = vrot.lane.b32.xlu0 %v2008, 64
    %v2095 = vpop.permute.xlu0 %2094
    %2096 = vrot.lane.b32.xlu0 %v2009, 64
    %v2097 = vpop.permute.xlu0 %2096
    %v2106 = vsel %vm504, %v2019, %v1246
    %v2107 = vsel %vm504, %v2021, %v1247
    %v2108 = vsel %vm504, %v2023, %v1248
    %v2109 = vsel %vm504, %v2025, %v1249
    %v2110 = vsel %vm504, %v2027, %v1250
    %v2111 = vsel %vm504, %v2029, %v1251
    %v2112 = vsel %vm504, %v2031, %v1252
    %v2113 = vsel %vm504, %v2033, %v1253
    %v2114 = vsel %vm594, %v2106, %v2051
    %v2115 = vsel %vm594, %v2107, %v2053
    %v2116 = vsel %vm594, %v2108, %v2055
    %v2117 = vsel %vm594, %v2109, %v2057
    %v2118 = vsel %vm594, %v2110, %v2059
    %v2119 = vsel %vm594, %v2111, %v2061
    %v2120 = vsel %vm594, %v2112, %v2063
    %v2121 = vsel %vm594, %v2113, %v2065
    %vm2122 = vcmask 785408
    %v2123 = vsel %vm2122, %v2114, %v2083
    %v2124 = vsel %vm2122, %v2115, %v2085
    %v2125 = vsel %vm2122, %v2116, %v2087
    %v2126 = vsel %vm2122, %v2117, %v2089
    %v2127 = vsel %vm2122, %v2118, %v2091
    %v2128 = vsel %vm2122, %v2119, %v2093
    %v2129 = vsel %vm2122, %v2120, %v2095
    %v2130 = vsel %vm2122, %v2121, %v2097
    %v2131 = vpack.c.bf16 %v2124, %v2123
    %v2132 = vpack.c.bf16 %v2126, %v2125
    %v2133 = vpack.c.bf16 %v2128, %v2127
    %v2134 = vpack.c.bf16 %v2130, %v2129
    %v2135 = vld [vmem:[#allocation8] sm:$0xf]
    %v2136 = vld [vmem:[#allocation8 + $0x4] sm:$0xf]
    %v2137 = vld [vmem:[#allocation8 + $0x8] sm:$0xf]
    %v2138 = vld [vmem:[#allocation8 + $0xc] sm:$0xf]
    %v2139 = vld [vmem:[#allocation8 + $0x10] sm:$0xf]
    %v2140 = vld [vmem:[#allocation8 + $0x14] sm:$0xf]
    %v2141 = vld [vmem:[#allocation8 + $0x18] sm:$0xf]
    %v2142 = vld [vmem:[#allocation8 + $0x1c] sm:$0xf]
    %v2143 = vld [vmem:[#allocation8 + $0x20] sm:$0xf]
    %v2144 = vld [vmem:[#allocation8 + $0x24] sm:$0xf]
    %v2145 = vld [vmem:[#allocation8 + $0x28] sm:$0xf]
    %v2146 = vld [vmem:[#allocation8 + $0x2c] sm:$0xf]
    %v2147 = vld [vmem:[#allocation8 + $0x30] sm:$0xf]
    %v2148 = vld [vmem:[#allocation8 + $0x34] sm:$0xf]
    %v2149 = vld [vmem:[#allocation8 + $0x38] sm:$0xf]
    %v2150 = vld [vmem:[#allocation8 + $0x3c] sm:$0xf]
    %v2151 = vld [vmem:[%s5] sm:$0x1]
    %v2153 = vlaneseq
    %v2154 = vshrl.u32 %v2153, 7
    %v2155 = vsub.s32 0, %v2154
    %v2156 = vrot.slane %v2151, %v2155
    %v2174 = vunpack.c.l.b16 %v2135
    %v2175 = vunpack.c.l.b16 %v2136
    %v2176 = vunpack.c.l.b16 %v2137
    %v2177 = vunpack.c.l.b16 %v2138
    %v2178 = vunpack.c.l.b16 %v2139
    %v2179 = vunpack.c.l.b16 %v2140
    %v2180 = vunpack.c.l.b16 %v2141
    %v2181 = vunpack.c.l.b16 %v2142
    %v2182 = vunpack.c.l.b16 %v2143
    %v2183 = vunpack.c.l.b16 %v2144
    %v2184 = vunpack.c.l.b16 %v2145
    %v2185 = vunpack.c.l.b16 %v2146
    %v2186 = vunpack.c.l.b16 %v2147
    %v2187 = vunpack.c.l.b16 %v2148
    %v2188 = vunpack.c.l.b16 %v2149
    %v2189 = vunpack.c.l.b16 %v2150
    %v2190 = vpack.c.b16 %v2175, %v2174
    %v2191 = vpack.c.b16 %v2177, %v2176
    %v2192 = vpack.c.b16 %v2179, %v2178
    %v2193 = vpack.c.b16 %v2181, %v2180
    %v2194 = vpack.c.b16 %v2183, %v2182
    %v2195 = vpack.c.b16 %v2185, %v2184
    %v2196 = vpack.c.b16 %v2187, %v2186
    %v2197 = vpack.c.b16 %v2189, %v2188
    %2206 = vmatprep.subr.bf16.mxu0 0
    %2207 = vmatpush1.bf16.msra.mxu0 %v2197
    %2208 = vmatprep.subr.bf16.mxu0 0
    %2209 = vmatpush1.bf16.msra.mxu0 %v2196
    %2210 = vmatprep.subr.bf16.mxu0 0
    %2211 = vmatpush1.bf16.msra.mxu0 %v2195
    %2212 = vmatprep.subr.bf16.mxu0 0
    %2213 = vmatpush1.bf16.msra.mxu0 %v2194
    %2214 = vmatprep.subr.bf16.mxu0 0
    %2215 = vmatpush1.bf16.msra.mxu0 %v2193
    %2216 = vmatprep.subr.bf16.mxu0 0
    %2217 = vmatpush1.bf16.msra.mxu0 %v2192
    %2218 = vmatprep.subr.bf16.mxu0 0
    %2219 = vmatpush1.bf16.msra.mxu0 %v2191
    %2220 = vmatprep.subr.bf16.mxu0 0
    %2221 = vmatpush1.bf16.msra.mxu0 %v2190
    %2222 = vmatprep.subr.bf16.mxu0 0
    %2223 = vmatpush2.bf16.msra.mxu0 0
    %2224 = vmatprep.subr.bf16.mxu0 0
    %2225 = vmatpush2.bf16.msra.mxu0 0
    %2226 = vmatprep.subr.bf16.mxu0 0
    %2227 = vmatpush2.bf16.msra.mxu0 0
    %2228 = vmatprep.subr.bf16.mxu0 0
    %2229 = vmatpush2.bf16.msra.mxu0 0
    %2230 = vmatprep.subr.bf16.mxu0 0
    %2231 = vmatpush2.bf16.msra.mxu0 0
    %2232 = vmatprep.subr.bf16.mxu0 0
    %2233 = vmatpush2.bf16.msra.mxu0 0
    %2234 = vmatprep.subr.bf16.mxu0 0
    %2235 = vmatpush2.bf16.msra.mxu0 0
    %2236 = vmatprep.subr.bf16.mxu0 0
    %2237 = vmatpush2.bf16.msra.mxu0 0
    %2238 = vmatprep.mubr.bf16.mxu0 0
    %2239 = vmatmul.mubr.bf16.gmra.mxu0 %v2131
    %v2240 = vpop.f32.mrf.mxu0
    %v2241 = vadd.f32 %v2156, %v2240
    %v2242 = vpop.f32.mrf.mxu0
    %v2243 = vpop.f32.mrf.mxu0
    %v2244 = vadd.f32 %v2156, %v2243
    %v2245 = vpop.f32.mrf.mxu0
    %2246 = vmatprep.mubr.bf16.mxu0 0
    %2247 = vmatmul.mubr.bf16.gmra.mxu0 %v2132
    %v2248 = vpop.f32.mrf.mxu0
    %v2249 = vadd.f32 %v2156, %v2248
    %v2250 = vpop.f32.mrf.mxu0
    %v2251 = vpop.f32.mrf.mxu0
    %v2252 = vadd.f32 %v2156, %v2251
    %v2253 = vpop.f32.mrf.mxu0
    %2254 = vmatprep.mubr.bf16.mxu0 0
    %2255 = vmatmul.mubr.bf16.gmra.mxu0 %v2133
    %v2256 = vpop.f32.mrf.mxu0
    %v2257 = vadd.f32 %v2156, %v2256
    %v2258 = vpop.f32.mrf.mxu0
    %v2259 = vpop.f32.mrf.mxu0
    %v2260 = vadd.f32 %v2156, %v2259
    %v2261 = vpop.f32.mrf.mxu0
    %2262 = vmatprep.mubr.bf16.mxu0 0
    %2263 = vmatmul.mubr.bf16.gmra.mxu0 %v2134
    %v2264 = vpop.f32.mrf.mxu0
    %v2265 = vadd.f32 %v2156, %v2264
    %v2266 = vpop.f32.mrf.mxu0
    %v2267 = vpop.f32.mrf.mxu0
    %v2268 = vadd.f32 %v2156, %v2267
    %v2269 = vpop.f32.mrf.mxu0
    %2270 = vdwg.mxu0
    %2271 = vst [vmem:[#allocation10] sm:$0xff] %v2241
    %2272 = vst [vmem:[#allocation10 + $0x8] sm:$0xff] %v2244
    %2273 = vst [vmem:[#allocation10 + $0x10] sm:$0xff] %v2249
    %2274 = vst [vmem:[#allocation10 + $0x18] sm:$0xff] %v2252
    %2275 = vst [vmem:[#allocation10 + $0x20] sm:$0xff] %v2257
    %2276 = vst [vmem:[#allocation10 + $0x28] sm:$0xff] %v2260
    %2277 = vst [vmem:[#allocation10 + $0x30] sm:$0xff] %v2265
    %2278 = vst [vmem:[#allocation10 + $0x38] sm:$0xff] %v2268
    // Predicated region
    $region42: #{tpu_custom_call.1} parent=1 // pred_check
      _
    $region43: #{tpu_custom_call.1} parent=1 // pred_check_branch
      %2280 = sbr.rel (0) target = $region45
    $region44: #{tpu_custom_call.1} parent=1 // pred_region
      %s2282 = ssub.s32 1024, 1024
      %2283 = vsyncadd [#allocation4], %s2282
      %s2284 = sshll.u32 [#allocation10], 4
      %s2285 = int_to_ptr.vmem [resolvable:$true] %s2284
      %2290 = dma.vmem_to_hbm [thread:$0]  %s2285, 1024, %s6, [#allocation4], 128, 128, 8
    $region45: #{tpu_custom_call.1} parent=1 // pred_fallthru
      _
    // Predicated region
    $region46: #{tpu_custom_call.1} parent=1 // pred_check
      _
    $region47: #{tpu_custom_call.1} parent=1 // pred_check_branch
      %2292 = sbr.rel (0) target = $region49
    $region48: #{tpu_custom_call.1} parent=1 // pred_region
      %2293 = dma.done [#allocation4], 1024
    $region49: #{tpu_custom_call.1} parent=1 // pred_fallthru
      _
    %2294 = vsyncpa [#allocation3], 1
    %2295 = vsyncpa [#allocation6], 1
    %2296 = vsyncpa [#allocation9], 1
    %2297 = vsyncpa [#allocation4], 1

</llo_original>
